<compile_context>
chip_gen: v5e
topology: v5e:2x2
jax: 0.10.0
libtpu: 0.0.40
codegen_flags: <defaults>
</compile_context>

<pallas_src>
import jax
import jax.numpy as jnp
from jax.experimental import pallas as pl
from jax.experimental.pallas import tpu as pltpu

LANE = 128                        # TPU lane width; K / Cout padded to multiples.
COMPUTE_DTYPE = jnp.bfloat16      # MXU input dtype (set jnp.float32 to track
                                  # PyTorch f32 numerics more closely).


def _ru(x, m):
    """Round x up to a multiple of m."""
    return (x + m - 1) // m * m


def _pick_batch_tile(n, bmax):
    """Largest batch tile <= bmax that still leaves >= 2 grid steps (megacore)."""
    if n <= 1:
        return 1
    return max(1, min(bmax, (n + 1) // 2))


# ----------------------------------------------------------------------------
# Pallas kernels
# ----------------------------------------------------------------------------
def _conv_bn_relu_pool_kernel(x_ref, w_ref, shift_ref, o_ref):
    """relu(X @ W + shift) followed by fused 2x2 maxpool, for B images.

    x_ref:     (B, 4*PHW_pad, Kpad)  im2col rows; per image 4 contiguous blocks
                                     = the four 2x2-pool-window positions.
    w_ref:     (Kpad, Cpad)          BN-scale-folded, zero-padded weights.
    shift_ref: (1, Cpad)             folded conv-bias / BN shift (f32).
    o_ref:     (B, PHW_pad, C_store) pooled output; only the real channel lanes
                                     are stored (narrow store => far less HBM).
    """
    b, rows, kpad = x_ref.shape
    phw = rows // 4
    cpad = w_ref.shape[1]
    # One large matmul for the whole batch tile (M = B * 4 * PHW_pad).
    x = x_ref[...].reshape(b * rows, kpad)
    y = jnp.dot(x, w_ref[...], preferred_element_type=jnp.float32)
    y = jnp.maximum(y + shift_ref[...], 0.0)
    # Fused 2x2 maxpool: elementwise max of the 4 pool-position blocks.
    y = y.reshape(b, 4, phw, cpad)
    y = jnp.maximum(jnp.maximum(y[:, 0], y[:, 1]),
                    jnp.maximum(y[:, 2], y[:, 3]))          # (B, PHW_pad, Cpad)
    o_ref[...] = y[:, :, : o_ref.shape[2]]


def _fc_stack_kernel(x_ref, w1_ref, w2_ref, w3_ref, w4_ref, w5_ref,
                     s1_ref, s2_ref, s3_ref, s4_ref, s5_ref, o_ref):
    """fc1..fc4 (+folded BN +ReLU) and fc5, fully fused; activations stay in VMEM."""
    cd = x_ref.dtype
    h = x_ref[...]
    h = jnp.maximum(jnp.dot(h, w1_ref[...], preferred_element_type=jnp.float32)
                    + s1_ref[...], 0.0).astype(cd)
    h = jnp.maximum(jnp.dot(h, w2_ref[...], preferred_element_type=jnp.float32)
                    + s2_ref[...], 0.0).astype(cd)
    h = jnp.maximum(jnp.dot(h, w3_ref[...], preferred_element_type=jnp.float32)
                    + s3_ref[...], 0.0).astype(cd)
    h = jnp.maximum(jnp.dot(h, w4_ref[...], preferred_element_type=jnp.float32)
                    + s4_ref[...], 0.0).astype(cd)
    o_ref[...] = (jnp.dot(h, w5_ref[...], preferred_element_type=jnp.float32)
                  + s5_ref[...])


# ----------------------------------------------------------------------------
# pallas_call wrappers
# ----------------------------------------------------------------------------
def conv_bn_relu_pool(patches, w, shift, *, c_store, bmax):
    """patches: (N, 4*PHW_pad, Kpad); w: (Kpad, Cpad); shift: (1, Cpad).

    Returns (N, PHW_pad, c_store) f32.  Grid over batch tiles, 'parallel' so
    the pipeline double-buffers and v7x megacore can split tiles across cores.
    Tiles are sized to fit the smallest (v5e, 16 MiB) default scoped VMEM.
    """
    n, rows, kpad = patches.shape
    cpad = w.shape[1]
    phw_pad = rows // 4
    bt = _pick_batch_tile(n, bmax)
    n_pad = _ru(n, bt)
    patches = patches.astype(COMPUTE_DTYPE)
    if n_pad != n:
        patches = jnp.pad(patches, ((0, n_pad - n), (0, 0), (0, 0)))
    out = pl.pallas_call(
        _conv_bn_relu_pool_kernel,
        out_shape=jax.ShapeDtypeStruct((n_pad, phw_pad, c_store), jnp.float32),
        grid=(n_pad // bt,),
        in_specs=[
            pl.BlockSpec((bt, rows, kpad), lambda i: (i, 0, 0)),
            pl.BlockSpec((kpad, cpad), lambda i: (0, 0)),
            pl.BlockSpec((1, cpad), lambda i: (0, 0)),
        ],
        out_specs=pl.BlockSpec((bt, phw_pad, c_store), lambda i: (i, 0, 0)),
        compiler_params=pltpu.CompilerParams(
            dimension_semantics=("parallel",)),
    )(patches, w.astype(COMPUTE_DTYPE), shift)
    return out[:n]


def fc_stack(feat, ws, shifts, *, tile_m=512):
    """Run the five FC layers in one kernel; feat: (N, 400) unpadded f32."""
    n, k = feat.shape
    kpad = ws[0].shape[0]
    cpad = ws[-1].shape[1]
    n_pad = _ru(max(n, 8), 8)
    bm = min(n_pad, tile_m)
    n_pad = _ru(n_pad, bm)
    x = jnp.pad(feat, ((0, n_pad - n), (0, kpad - k))).astype(COMPUTE_DTYPE)
    ws = [w.astype(COMPUTE_DTYPE) for w in ws]

    in_specs = [pl.BlockSpec((bm, kpad), lambda i: (i, 0))]
    in_specs += [pl.BlockSpec(w.shape, lambda i: (0, 0)) for w in ws]
    in_specs += [pl.BlockSpec(s.shape, lambda i: (0, 0)) for s in shifts]

    return pl.pallas_call(
        _fc_stack_kernel,
        out_shape=jax.ShapeDtypeStruct((n_pad, cpad), jnp.float32),
        grid=(n_pad // bm,),
        in_specs=in_specs,
        out_specs=pl.BlockSpec((bm, cpad), lambda i: (i, 0)),
        compiler_params=pltpu.CompilerParams(
            dimension_semantics=("parallel",)),
    )(x, *ws, *shifts)


# ----------------------------------------------------------------------------
# Wrapper-side glue: pool-ordered im2col, BN folding, padding
# ----------------------------------------------------------------------------
def im2col_pooled(x_nhwc, kh, kw):
    """(N,H,W,C) -> (N, 4*PHW_pad, Kpad) in COMPUTE_DTYPE.

    Feature order is c-major then (kh, kw), matching PyTorch's
    Conv2d weight.reshape(Cout, -1).  Rows are grouped into 4 contiguous
    blocks (one per 2x2-pool position), each block row-major over pooled
    pixels, padded so PHW_pad % 8 == 0 and Kpad % 128 == 0.
    Returns (patches, phw, phw_pad).
    """
    n, h, w, c = x_nhwc.shape
    x_nhwc = x_nhwc.astype(COMPUTE_DTYPE)   # half-size HBM intermediates (bf16)
    oh, ow = h - kh + 1, w - kw + 1
    oh2, ow2 = oh // 2, ow // 2
    f = c * kh * kw

    patches = []
    for i in range(kh):
        for j in range(kw):
            patches.append(x_nhwc[:, i:i + oh, j:j + ow, :])    # (N,OH,OW,C)
    p = jnp.stack(patches, axis=-1)                             # (N,OH,OW,C,KH*KW)
    p = p.reshape(n, oh, ow, f)                                 # c-major, then (kh,kw)

    # Reorder rows so the 4 positions of each 2x2 pool window land in 4
    # contiguous blocks of PHW rows each.
    p = p.reshape(n, oh2, 2, ow2, 2, f)
    p = jnp.transpose(p, (0, 2, 4, 1, 3, 5))                    # (N,2,2,OH2,OW2,F)
    phw = oh2 * ow2
    phw_pad = _ru(phw, 8)
    p = p.reshape(n, 4, phw, f)
    p = jnp.pad(p, ((0, 0), (0, 0), (0, phw_pad - phw), (0, 0)))
    p = p.reshape(n, 4 * phw_pad, f)

    kpad = _ru(f, LANE)
    p = jnp.pad(p, ((0, 0), (0, 0), (0, kpad - f)))
    return p, phw, phw_pad


def prep_linear(w_kc, bias, *, kpad, cpad, bn=None, eps=1e-5):
    """Fold eval-mode BN into (w, shift) and zero-pad to (kpad, cpad)."""
    k, c = w_kc.shape
    if bn is not None:
        gamma, beta, mean, var = bn
        scale = gamma / jnp.sqrt(var + eps)
        w_kc = w_kc * scale[None, :]
        shift = beta + scale * (bias - mean)
    else:
        shift = bias
    w = jnp.pad(w_kc, ((0, kpad - k), (0, cpad - c)))
    shift = jnp.pad(shift, (0, cpad - c)).reshape(1, cpad).astype(jnp.float32)
    return w, shift


# ----------------------------------------------------------------------------
# Parameters & forward pass
# ----------------------------------------------------------------------------
def init_params(key):
    def nrm(k, shape, s=0.1):
        return s * jax.random.normal(k, shape, dtype=jnp.float32)

    ks = jax.random.split(key, 26)
    p = {}
    # PyTorch layouts: conv (Cout, Cin, KH, KW), fc (out, in).
    p["conv1_w"] = nrm(ks[0], (6, 3, 5, 5));    p["conv1_b"] = nrm(ks[1], (6,))
    p["conv2_w"] = nrm(ks[2], (16, 6, 5, 5));   p["conv2_b"] = nrm(ks[3], (16,))
    p["fc1_w"] = nrm(ks[4], (120, 400));        p["fc1_b"] = nrm(ks[5], (120,))
    p["fc2_w"] = nrm(ks[6], (84, 120));         p["fc2_b"] = nrm(ks[7], (84,))
    p["fc3_w"] = nrm(ks[8], (64, 84));          p["fc3_b"] = nrm(ks[9], (64,))
    p["fc4_w"] = nrm(ks[10], (42, 64));         p["fc4_b"] = nrm(ks[11], (42,))
    p["fc5_w"] = nrm(ks[12], (10, 42));         p["fc5_b"] = nrm(ks[13], (10,))
    # BatchNorm affine + running statistics (fresh PyTorch: mean=0, var=1).
    bn_dims = {"bn1": 6, "bn2": 16, "bn3": 120, "bn4": 84, "bn5": 64, "bn6": 42}
    for i, (name, d) in enumerate(bn_dims.items()):
        p[f"{name}_g"] = 1.0 + nrm(ks[14 + 2 * i], (d,))
        p[f"{name}_b"] = nrm(ks[15 + 2 * i], (d,))
        p[f"{name}_mean"] = jnp.zeros((d,), jnp.float32)
        p[f"{name}_var"] = jnp.ones((d,), jnp.float32)
    return p


def _bn_tuple(p, name):
    return (p[f"{name}_g"], p[f"{name}_b"], p[f"{name}_mean"], p[f"{name}_var"])


def net_forward(params, x_nchw):
    p = params
    n = x_nchw.shape[0]
    x = jnp.transpose(x_nchw, (0, 2, 3, 1))                          # NHWC (N,32,32,3)

    # conv1 (3->6, k5) + bn1 + relu + maxpool(2,2): one fused, batch-tiled kernel.
    patches1, phw1, _ = im2col_pooled(x, 5, 5)                       # (N, 800, 128)
    w1, sh1 = prep_linear(p["conv1_w"].reshape(6, -1).T, p["conv1_b"],
                          kpad=patches1.shape[-1], cpad=LANE, bn=_bn_tuple(p, "bn1"))
    y1 = conv_bn_relu_pool(patches1, w1, sh1, c_store=8, bmax=16)    # (N, 200, 8)
    x2 = y1[:, :phw1, :6].reshape(n, 14, 14, 6)

    # conv2 (6->16, k5) + bn2 + relu + maxpool(2,2): one fused, batch-tiled kernel.
    patches2, phw2, _ = im2col_pooled(x2, 5, 5)                      # (N, 128, 256)
    w2, sh2 = prep_linear(p["conv2_w"].reshape(16, -1).T, p["conv2_b"],
                          kpad=patches2.shape[-1], cpad=LANE, bn=_bn_tuple(p, "bn2"))
    y2 = conv_bn_relu_pool(patches2, w2, sh2, c_store=16, bmax=64)   # (N, 32, 16)

    # Flatten in PyTorch (C, H, W) order: x.view(-1, 16*5*5).
    feat = jnp.transpose(y2[:, :phw2, :], (0, 2, 1)).reshape(n, 400)

    # fc1..fc5 (+BN+ReLU) fused into a single Pallas kernel (weights stay in VMEM).
    kfc = _ru(400, LANE)                                             # 512
    layer_specs = [("fc1", "bn3", kfc), ("fc2", "bn4", LANE), ("fc3", "bn5", LANE),
                   ("fc4", "bn6", LANE), ("fc5", None, LANE)]
    ws, shs = [], []
    for fc, bn, kd in layer_specs:
        bn_t = None if bn is None else _bn_tuple(p, bn)
        w, sh = prep_linear(p[f"{fc}_w"].T, p[f"{fc}_b"], kpad=kd, cpad=LANE, bn=bn_t)
        ws.append(w)
        shs.append(sh)
    out = fc_stack(feat, ws, shs)                                    # (N_pad, 128)
    return out[:n, :10]


if __name__ == "__main__":
    key = jax.random.PRNGKey(0)
    pkey, xkey = jax.random.split(key)
    params = init_params(pkey)
    # CIFAR-shaped input required by the fc1 = Linear(16*5*5, ...) contract.
    x = jax.random.normal(xkey, (2, 3, 32, 32), dtype=jnp.float32)

    logits = jax.jit(net_forward)(params, x)
    logits = jax.block_until_ready(logits)
    assert logits.shape == (2, 10) and logits.dtype == jnp.float32
    assert bool(jnp.all(jnp.isfinite(logits)))
    print("KERNEL_OK")
</pallas_src>

<mosaic_0001>
module attributes {stable_mosaic.version = 11 : i64} {
  func.func @_conv_bn_relu_pool_kernel(%arg0: i32, %arg1: memref<1x800x128xbf16, #tpu.memory_space<vmem>>, %arg2: memref<128x128xbf16, #tpu.memory_space<vmem>>, %arg3: memref<1x128xf32, #tpu.memory_space<vmem>>, %arg4: memref<1x200x8xf32, #tpu.memory_space<vmem>>) attributes {dimension_semantics = [#tpu.dimension_semantics<parallel>], iteration_bounds = array<i64: 2>, scalar_prefetch = 0 : i64, scratch_operands = 0 : i64, tpu.core_type = #tpu.core_type<tc>, window_params = [{transform_indices = @transform_0, window_bounds = array<i64: 1, 800, 128>}, {pipeline_mode = #tpu.pipeline_mode<synchronous>, transform_indices = @transform_1, window_bounds = array<i64: 128, 128>}, {pipeline_mode = #tpu.pipeline_mode<synchronous>, transform_indices = @transform_2, window_bounds = array<i64: 1, 128>}, {transform_indices = @transform_3, window_bounds = array<i64: 1, 200, 8>}]} {
    %c0 = arith.constant 0 : index
    %c0_0 = arith.constant 0 : index
    %c0_1 = arith.constant 0 : index
    %0 = vector.load %arg1[%c0, %c0_0, %c0_1] : memref<1x800x128xbf16, #tpu.memory_space<vmem>>, vector<1x800x128xbf16>
    %1 = vector.shape_cast %0 : vector<1x800x128xbf16> to vector<800x128xbf16>
    %c0_2 = arith.constant 0 : index
    %c0_3 = arith.constant 0 : index
    %2 = vector.load %arg2[%c0_2, %c0_3] : memref<128x128xbf16, #tpu.memory_space<vmem>>, vector<128x128xbf16>
    %cst = arith.constant dense<0.000000e+00> : vector<800x128xf32>
    %3 = tpu.matmul %1, %2, %cst {dimension_numbers = #tpu.dot_dimension_numbers<[1], [0], [0], [1], [0, 0, 1, 1], [], []>} : vector<800x128xbf16>, vector<128x128xbf16>, vector<800x128xf32> -> vector<800x128xf32>
    %c0_4 = arith.constant 0 : index
    %c0_5 = arith.constant 0 : index
    %4 = vector.load %arg3[%c0_4, %c0_5] : memref<1x128xf32, #tpu.memory_space<vmem>>, vector<1x128xf32>
    %5 = vector.broadcast %4 : vector<1x128xf32> to vector<800x128xf32>
    %6 = arith.addf %3, %5 : vector<800x128xf32>
    %cst_6 = arith.constant 0.000000e+00 : f32
    %7 = vector.broadcast %cst_6 : f32 to vector<800x128xf32>
    %8 = arith.maximumf %6, %7 : vector<800x128xf32>
    %9 = vector.shape_cast %8 : vector<800x128xf32> to vector<1x4x200x128xf32>
    %10 = vector.extract_strided_slice %9 {offsets = [0, 0, 0, 0], sizes = [1, 1, 200, 128], strides = [1, 1, 1, 1]} : vector<1x4x200x128xf32> to vector<1x1x200x128xf32>
    %11 = vector.shape_cast %10 : vector<1x1x200x128xf32> to vector<1x200x128xf32>
    %12 = vector.extract_strided_slice %9 {offsets = [0, 1, 0, 0], sizes = [1, 1, 200, 128], strides = [1, 1, 1, 1]} : vector<1x4x200x128xf32> to vector<1x1x200x128xf32>
    %13 = vector.shape_cast %12 : vector<1x1x200x128xf32> to vector<1x200x128xf32>
    %14 = arith.maximumf %11, %13 : vector<1x200x128xf32>
    %15 = vector.extract_strided_slice %9 {offsets = [0, 2, 0, 0], sizes = [1, 1, 200, 128], strides = [1, 1, 1, 1]} : vector<1x4x200x128xf32> to vector<1x1x200x128xf32>
    %16 = vector.shape_cast %15 : vector<1x1x200x128xf32> to vector<1x200x128xf32>
    %17 = vector.extract_strided_slice %9 {offsets = [0, 3, 0, 0], sizes = [1, 1, 200, 128], strides = [1, 1, 1, 1]} : vector<1x4x200x128xf32> to vector<1x1x200x128xf32>
    %18 = vector.shape_cast %17 : vector<1x1x200x128xf32> to vector<1x200x128xf32>
    %19 = arith.maximumf %16, %18 : vector<1x200x128xf32>
    %20 = arith.maximumf %14, %19 : vector<1x200x128xf32>
    %21 = vector.extract_strided_slice %20 {offsets = [0, 0, 0], sizes = [1, 200, 8], strides = [1, 1, 1]} : vector<1x200x128xf32> to vector<1x200x8xf32>
    %c0_7 = arith.constant 0 : index
    %c0_8 = arith.constant 0 : index
    %c0_9 = arith.constant 0 : index
    %22 = vector.load %arg4[%c0_7, %c0_8, %c0_9] : memref<1x200x8xf32, #tpu.memory_space<vmem>>, vector<1x200x8xf32>
    tpu.vector_store %arg4[%c0_7, %c0_8, %c0_9], %21 {strides = array<i32>} : memref<1x200x8xf32, #tpu.memory_space<vmem>>, vector<1x200x8xf32>,
    return
  }
  func.func @transform_0(%arg0: i32) -> (i32, i32, i32) {
    %c0_i32 = arith.constant 0 : i32
    %c0_i32_0 = arith.constant 0 : i32
    %c0_i32_1 = arith.constant 0 : i32
    return %arg0, %c0_i32, %c0_i32_0 : i32, i32, i32
  }
  func.func @transform_1(%arg0: i32) -> (i32, i32) {
    %c0_i32 = arith.constant 0 : i32
    %c0_i32_0 = arith.constant 0 : i32
    %c0_i32_1 = arith.constant 0 : i32
    return %c0_i32, %c0_i32_0 : i32, i32
  }
  func.func @transform_2(%arg0: i32) -> (i32, i32) {
    %c0_i32 = arith.constant 0 : i32
    %c0_i32_0 = arith.constant 0 : i32
    %c0_i32_1 = arith.constant 0 : i32
    return %c0_i32, %c0_i32_0 : i32, i32
  }
  func.func @transform_3(%arg0: i32) -> (i32, i32, i32) {
    %c0_i32 = arith.constant 0 : i32
    %c0_i32_0 = arith.constant 0 : i32
    %c0_i32_1 = arith.constant 0 : i32
    return %arg0, %c0_i32, %c0_i32_0 : i32, i32, i32
  }
}

module attributes {stable_mosaic.version = 11 : i64} {
  func.func @_conv_bn_relu_pool_kernel(%arg0: i32, %arg1: memref<1x128x256xbf16, #tpu.memory_space<vmem>>, %arg2: memref<256x128xbf16, #tpu.memory_space<vmem>>, %arg3: memref<1x128xf32, #tpu.memory_space<vmem>>, %arg4: memref<1x32x16xf32, #tpu.memory_space<vmem>>) attributes {dimension_semantics = [#tpu.dimension_semantics<parallel>], iteration_bounds = array<i64: 2>, scalar_prefetch = 0 : i64, scratch_operands = 0 : i64, tpu.core_type = #tpu.core_type<tc>, window_params = [{transform_indices = @transform_0, window_bounds = array<i64: 1, 128, 256>}, {pipeline_mode = #tpu.pipeline_mode<synchronous>, transform_indices = @transform_1, window_bounds = array<i64: 256, 128>}, {pipeline_mode = #tpu.pipeline_mode<synchronous>, transform_indices = @transform_2, window_bounds = array<i64: 1, 128>}, {transform_indices = @transform_3, window_bounds = array<i64: 1, 32, 16>}]} {
    %c0 = arith.constant 0 : index
    %c0_0 = arith.constant 0 : index
    %c0_1 = arith.constant 0 : index
    %0 = vector.load %arg1[%c0, %c0_0, %c0_1] : memref<1x128x256xbf16, #tpu.memory_space<vmem>>, vector<1x128x256xbf16>
    %1 = vector.shape_cast %0 : vector<1x128x256xbf16> to vector<128x256xbf16>
    %c0_2 = arith.constant 0 : index
    %c0_3 = arith.constant 0 : index
    %2 = vector.load %arg2[%c0_2, %c0_3] : memref<256x128xbf16, #tpu.memory_space<vmem>>, vector<256x128xbf16>
    %cst = arith.constant dense<0.000000e+00> : vector<128x128xf32>
    %3 = tpu.matmul %1, %2, %cst {dimension_numbers = #tpu.dot_dimension_numbers<[1], [0], [0], [1], [0, 0, 1, 1], [], []>} : vector<128x256xbf16>, vector<256x128xbf16>, vector<128x128xf32> -> vector<128x128xf32>
    %c0_4 = arith.constant 0 : index
    %c0_5 = arith.constant 0 : index
    %4 = vector.load %arg3[%c0_4, %c0_5] : memref<1x128xf32, #tpu.memory_space<vmem>>, vector<1x128xf32>
    %5 = vector.broadcast %4 : vector<1x128xf32> to vector<128x128xf32>
    %6 = arith.addf %3, %5 : vector<128x128xf32>
    %cst_6 = arith.constant 0.000000e+00 : f32
    %7 = vector.broadcast %cst_6 : f32 to vector<128x128xf32>
    %8 = arith.maximumf %6, %7 : vector<128x128xf32>
    %9 = vector.shape_cast %8 : vector<128x128xf32> to vector<1x4x32x128xf32>
    %10 = vector.extract_strided_slice %9 {offsets = [0, 0, 0, 0], sizes = [1, 1, 32, 128], strides = [1, 1, 1, 1]} : vector<1x4x32x128xf32> to vector<1x1x32x128xf32>
    %11 = vector.shape_cast %10 : vector<1x1x32x128xf32> to vector<1x32x128xf32>
    %12 = vector.extract_strided_slice %9 {offsets = [0, 1, 0, 0], sizes = [1, 1, 32, 128], strides = [1, 1, 1, 1]} : vector<1x4x32x128xf32> to vector<1x1x32x128xf32>
    %13 = vector.shape_cast %12 : vector<1x1x32x128xf32> to vector<1x32x128xf32>
    %14 = arith.maximumf %11, %13 : vector<1x32x128xf32>
    %15 = vector.extract_strided_slice %9 {offsets = [0, 2, 0, 0], sizes = [1, 1, 32, 128], strides = [1, 1, 1, 1]} : vector<1x4x32x128xf32> to vector<1x1x32x128xf32>
    %16 = vector.shape_cast %15 : vector<1x1x32x128xf32> to vector<1x32x128xf32>
    %17 = vector.extract_strided_slice %9 {offsets = [0, 3, 0, 0], sizes = [1, 1, 32, 128], strides = [1, 1, 1, 1]} : vector<1x4x32x128xf32> to vector<1x1x32x128xf32>
    %18 = vector.shape_cast %17 : vector<1x1x32x128xf32> to vector<1x32x128xf32>
    %19 = arith.maximumf %16, %18 : vector<1x32x128xf32>
    %20 = arith.maximumf %14, %19 : vector<1x32x128xf32>
    %21 = vector.extract_strided_slice %20 {offsets = [0, 0, 0], sizes = [1, 32, 16], strides = [1, 1, 1]} : vector<1x32x128xf32> to vector<1x32x16xf32>
    %c0_7 = arith.constant 0 : index
    %c0_8 = arith.constant 0 : index
    %c0_9 = arith.constant 0 : index
    %22 = vector.load %arg4[%c0_7, %c0_8, %c0_9] : memref<1x32x16xf32, #tpu.memory_space<vmem>>, vector<1x32x16xf32>
    tpu.vector_store %arg4[%c0_7, %c0_8, %c0_9], %21 {strides = array<i32>} : memref<1x32x16xf32, #tpu.memory_space<vmem>>, vector<1x32x16xf32>,
    return
  }
  func.func @transform_0(%arg0: i32) -> (i32, i32, i32) {
    %c0_i32 = arith.constant 0 : i32
    %c0_i32_0 = arith.constant 0 : i32
    %c0_i32_1 = arith.constant 0 : i32
    return %arg0, %c0_i32, %c0_i32_0 : i32, i32, i32
  }
  func.func @transform_1(%arg0: i32) -> (i32, i32) {
    %c0_i32 = arith.constant 0 : i32
    %c0_i32_0 = arith.constant 0 : i32
    %c0_i32_1 = arith.constant 0 : i32
    return %c0_i32, %c0_i32_0 : i32, i32
  }
  func.func @transform_2(%arg0: i32) -> (i32, i32) {
    %c0_i32 = arith.constant 0 : i32
    %c0_i32_0 = arith.constant 0 : i32
    %c0_i32_1 = arith.constant 0 : i32
    return %c0_i32, %c0_i32_0 : i32, i32
  }
  func.func @transform_3(%arg0: i32) -> (i32, i32, i32) {
    %c0_i32 = arith.constant 0 : i32
    %c0_i32_0 = arith.constant 0 : i32
    %c0_i32_1 = arith.constant 0 : i32
    return %arg0, %c0_i32, %c0_i32_0 : i32, i32, i32
  }
}

module attributes {stable_mosaic.version = 11 : i64} {
  func.func @_fc_stack_kernel(%arg0: i32, %arg1: memref<8x512xbf16, #tpu.memory_space<vmem>>, %arg2: memref<512x128xbf16, #tpu.memory_space<vmem>>, %arg3: memref<128x128xbf16, #tpu.memory_space<vmem>>, %arg4: memref<128x128xbf16, #tpu.memory_space<vmem>>, %arg5: memref<128x128xbf16, #tpu.memory_space<vmem>>, %arg6: memref<128x128xbf16, #tpu.memory_space<vmem>>, %arg7: memref<1x128xf32, #tpu.memory_space<vmem>>, %arg8: memref<1x128xf32, #tpu.memory_space<vmem>>, %arg9: memref<1x128xf32, #tpu.memory_space<vmem>>, %arg10: memref<1x128xf32, #tpu.memory_space<vmem>>, %arg11: memref<1x128xf32, #tpu.memory_space<vmem>>, %arg12: memref<8x128xf32, #tpu.memory_space<vmem>>) attributes {dimension_semantics = [#tpu.dimension_semantics<parallel>], iteration_bounds = array<i64: 1>, scalar_prefetch = 0 : i64, scratch_operands = 0 : i64, tpu.core_type = #tpu.core_type<tc>, window_params = [{transform_indices = @transform_0, window_bounds = array<i64: 8, 512>}, {pipeline_mode = #tpu.pipeline_mode<synchronous>, transform_indices = @transform_1, window_bounds = array<i64: 512, 128>}, {pipeline_mode = #tpu.pipeline_mode<synchronous>, transform_indices = @transform_2, window_bounds = array<i64: 128, 128>}, {pipeline_mode = #tpu.pipeline_mode<synchronous>, transform_indices = @transform_3, window_bounds = array<i64: 128, 128>}, {pipeline_mode = #tpu.pipeline_mode<synchronous>, transform_indices = @transform_4, window_bounds = array<i64: 128, 128>}, {pipeline_mode = #tpu.pipeline_mode<synchronous>, transform_indices = @transform_5, window_bounds = array<i64: 128, 128>}, {pipeline_mode = #tpu.pipeline_mode<synchronous>, transform_indices = @transform_6, window_bounds = array<i64: 1, 128>}, {pipeline_mode = #tpu.pipeline_mode<synchronous>, transform_indices = @transform_7, window_bounds = array<i64: 1, 128>}, {pipeline_mode = #tpu.pipeline_mode<synchronous>, transform_indices = @transform_8, window_bounds = array<i64: 1, 128>}, {pipeline_mode = #tpu.pipeline_mode<synchronous>, transform_indices = @transform_9, window_bounds = array<i64: 1, 128>}, {pipeline_mode = #tpu.pipeline_mode<synchronous>, transform_indices = @transform_10, window_bounds = array<i64: 1, 128>}, {transform_indices = @transform_11, window_bounds = array<i64: 8, 128>}]} {
    %c0 = arith.constant 0 : index
    %c0_0 = arith.constant 0 : index
    %0 = vector.load %arg1[%c0, %c0_0] : memref<8x512xbf16, #tpu.memory_space<vmem>>, vector<8x512xbf16>
    %c0_1 = arith.constant 0 : index
    %c0_2 = arith.constant 0 : index
    %1 = vector.load %arg2[%c0_1, %c0_2] : memref<512x128xbf16, #tpu.memory_space<vmem>>, vector<512x128xbf16>
    %cst = arith.constant dense<0.000000e+00> : vector<8x128xf32>
    %2 = tpu.matmul %0, %1, %cst {dimension_numbers = #tpu.dot_dimension_numbers<[1], [0], [0], [1], [0, 0, 1, 1], [], []>} : vector<8x512xbf16>, vector<512x128xbf16>, vector<8x128xf32> -> vector<8x128xf32>
    %c0_3 = arith.constant 0 : index
    %c0_4 = arith.constant 0 : index
    %3 = vector.load %arg7[%c0_3, %c0_4] : memref<1x128xf32, #tpu.memory_space<vmem>>, vector<1x128xf32>
    %4 = vector.broadcast %3 : vector<1x128xf32> to vector<8x128xf32>
    %5 = arith.addf %2, %4 : vector<8x128xf32>
    %cst_5 = arith.constant 0.000000e+00 : f32
    %6 = vector.broadcast %cst_5 : f32 to vector<8x128xf32>
    %7 = arith.maximumf %5, %6 : vector<8x128xf32>
    %8 = arith.truncf %7 : vector<8x128xf32> to vector<8x128xbf16>
    %c0_6 = arith.constant 0 : index
    %c0_7 = arith.constant 0 : index
    %9 = vector.load %arg3[%c0_6, %c0_7] : memref<128x128xbf16, #tpu.memory_space<vmem>>, vector<128x128xbf16>
    %cst_8 = arith.constant dense<0.000000e+00> : vector<8x128xf32>
    %10 = tpu.matmul %8, %9, %cst_8 {dimension_numbers = #tpu.dot_dimension_numbers<[1], [0], [0], [1], [0, 0, 1, 1], [], []>} : vector<8x128xbf16>, vector<128x128xbf16>, vector<8x128xf32> -> vector<8x128xf32>
    %c0_9 = arith.constant 0 : index
    %c0_10 = arith.constant 0 : index
    %11 = vector.load %arg8[%c0_9, %c0_10] : memref<1x128xf32, #tpu.memory_space<vmem>>, vector<1x128xf32>
    %12 = vector.broadcast %11 : vector<1x128xf32> to vector<8x128xf32>
    %13 = arith.addf %10, %12 : vector<8x128xf32>
    %cst_11 = arith.constant 0.000000e+00 : f32
    %14 = vector.broadcast %cst_11 : f32 to vector<8x128xf32>
    %15 = arith.maximumf %13, %14 : vector<8x128xf32>
    %16 = arith.truncf %15 : vector<8x128xf32> to vector<8x128xbf16>
    %c0_12 = arith.constant 0 : index
    %c0_13 = arith.constant 0 : index
    %17 = vector.load %arg4[%c0_12, %c0_13] : memref<128x128xbf16, #tpu.memory_space<vmem>>, vector<128x128xbf16>
    %cst_14 = arith.constant dense<0.000000e+00> : vector<8x128xf32>
    %18 = tpu.matmul %16, %17, %cst_14 {dimension_numbers = #tpu.dot_dimension_numbers<[1], [0], [0], [1], [0, 0, 1, 1], [], []>} : vector<8x128xbf16>, vector<128x128xbf16>, vector<8x128xf32> -> vector<8x128xf32>
    %c0_15 = arith.constant 0 : index
    %c0_16 = arith.constant 0 : index
    %19 = vector.load %arg9[%c0_15, %c0_16] : memref<1x128xf32, #tpu.memory_space<vmem>>, vector<1x128xf32>
    %20 = vector.broadcast %19 : vector<1x128xf32> to vector<8x128xf32>
    %21 = arith.addf %18, %20 : vector<8x128xf32>
    %cst_17 = arith.constant 0.000000e+00 : f32
    %22 = vector.broadcast %cst_17 : f32 to vector<8x128xf32>
    %23 = arith.maximumf %21, %22 : vector<8x128xf32>
    %24 = arith.truncf %23 : vector<8x128xf32> to vector<8x128xbf16>
    %c0_18 = arith.constant 0 : index
    %c0_19 = arith.constant 0 : index
    %25 = vector.load %arg5[%c0_18, %c0_19] : memref<128x128xbf16, #tpu.memory_space<vmem>>, vector<128x128xbf16>
    %cst_20 = arith.constant dense<0.000000e+00> : vector<8x128xf32>
    %26 = tpu.matmul %24, %25, %cst_20 {dimension_numbers = #tpu.dot_dimension_numbers<[1], [0], [0], [1], [0, 0, 1, 1], [], []>} : vector<8x128xbf16>, vector<128x128xbf16>, vector<8x128xf32> -> vector<8x128xf32>
    %c0_21 = arith.constant 0 : index
    %c0_22 = arith.constant 0 : index
    %27 = vector.load %arg10[%c0_21, %c0_22] : memref<1x128xf32, #tpu.memory_space<vmem>>, vector<1x128xf32>
    %28 = vector.broadcast %27 : vector<1x128xf32> to vector<8x128xf32>
    %29 = arith.addf %26, %28 : vector<8x128xf32>
    %cst_23 = arith.constant 0.000000e+00 : f32
    %30 = vector.broadcast %cst_23 : f32 to vector<8x128xf32>
    %31 = arith.maximumf %29, %30 : vector<8x128xf32>
    %32 = arith.truncf %31 : vector<8x128xf32> to vector<8x128xbf16>
    %c0_24 = arith.constant 0 : index
    %c0_25 = arith.constant 0 : index
    %33 = vector.load %arg6[%c0_24, %c0_25] : memref<128x128xbf16, #tpu.memory_space<vmem>>, vector<128x128xbf16>
    %cst_26 = arith.constant dense<0.000000e+00> : vector<8x128xf32>
    %34 = tpu.matmul %32, %33, %cst_26 {dimension_numbers = #tpu.dot_dimension_numbers<[1], [0], [0], [1], [0, 0, 1, 1], [], []>} : vector<8x128xbf16>, vector<128x128xbf16>, vector<8x128xf32> -> vector<8x128xf32>
    %c0_27 = arith.constant 0 : index
    %c0_28 = arith.constant 0 : index
    %35 = vector.load %arg11[%c0_27, %c0_28] : memref<1x128xf32, #tpu.memory_space<vmem>>, vector<1x128xf32>
    %36 = vector.broadcast %35 : vector<1x128xf32> to vector<8x128xf32>
    %37 = arith.addf %34, %36 : vector<8x128xf32>
    %c0_29 = arith.constant 0 : index
    %c0_30 = arith.constant 0 : index
    %38 = vector.load %arg12[%c0_29, %c0_30] : memref<8x128xf32, #tpu.memory_space<vmem>>, vector<8x128xf32>
    tpu.vector_store %arg12[%c0_29, %c0_30], %37 {strides = array<i32>} : memref<8x128xf32, #tpu.memory_space<vmem>>, vector<8x128xf32>,
    return
  }
  func.func @transform_0(%arg0: i32) -> (i32, i32) {
    %c0_i32 = arith.constant 0 : i32
    %c0_i32_0 = arith.constant 0 : i32
    return %arg0, %c0_i32 : i32, i32
  }
  func.func @transform_1(%arg0: i32) -> (i32, i32) {
    %c0_i32 = arith.constant 0 : i32
    %c0_i32_0 = arith.constant 0 : i32
    %c0_i32_1 = arith.constant 0 : i32
    return %c0_i32, %c0_i32_0 : i32, i32
  }
  func.func @transform_2(%arg0: i32) -> (i32, i32) {
    %c0_i32 = arith.constant 0 : i32
    %c0_i32_0 = arith.constant 0 : i32
    %c0_i32_1 = arith.constant 0 : i32
    return %c0_i32, %c0_i32_0 : i32, i32
  }
  func.func @transform_3(%arg0: i32) -> (i32, i32) {
    %c0_i32 = arith.constant 0 : i32
    %c0_i32_0 = arith.constant 0 : i32
    %c0_i32_1 = arith.constant 0 : i32
    return %c0_i32, %c0_i32_0 : i32, i32
  }
  func.func @transform_4(%arg0: i32) -> (i32, i32) {
    %c0_i32 = arith.constant 0 : i32
    %c0_i32_0 = arith.constant 0 : i32
    %c0_i32_1 = arith.constant 0 : i32
    return %c0_i32, %c0_i32_0 : i32, i32
  }
  func.func @transform_5(%arg0: i32) -> (i32, i32) {
    %c0_i32 = arith.constant 0 : i32
    %c0_i32_0 = arith.constant 0 : i32
    %c0_i32_1 = arith.constant 0 : i32
    return %c0_i32, %c0_i32_0 : i32, i32
  }
  func.func @transform_6(%arg0: i32) -> (i32, i32) {
    %c0_i32 = arith.constant 0 : i32
    %c0_i32_0 = arith.constant 0 : i32
    %c0_i32_1 = arith.constant 0 : i32
    return %c0_i32, %c0_i32_0 : i32, i32
  }
  func.func @transform_7(%arg0: i32) -> (i32, i32) {
    %c0_i32 = arith.constant 0 : i32
    %c0_i32_0 = arith.constant 0 : i32
    %c0_i32_1 = arith.constant 0 : i32
    return %c0_i32, %c0_i32_0 : i32, i32
  }
  func.func @transform_8(%arg0: i32) -> (i32, i32) {
    %c0_i32 = arith.constant 0 : i32
    %c0_i32_0 = arith.constant 0 : i32
    %c0_i32_1 = arith.constant 0 : i32
    return %c0_i32, %c0_i32_0 : i32, i32
  }
  func.func @transform_9(%arg0: i32) -> (i32, i32) {
    %c0_i32 = arith.constant 0 : i32
    %c0_i32_0 = arith.constant 0 : i32
    %c0_i32_1 = arith.constant 0 : i32
    return %c0_i32, %c0_i32_0 : i32, i32
  }
  func.func @transform_10(%arg0: i32) -> (i32, i32) {
    %c0_i32 = arith.constant 0 : i32
    %c0_i32_0 = arith.constant 0 : i32
    %c0_i32_1 = arith.constant 0 : i32
    return %c0_i32, %c0_i32_0 : i32, i32
  }
  func.func @transform_11(%arg0: i32) -> (i32, i32) {
    %c0_i32 = arith.constant 0 : i32
    %c0_i32_0 = arith.constant 0 : i32
    return %arg0, %c0_i32 : i32, i32
  }
}

</mosaic_0001>

<llo_original>
// kernel: net_forward.3
$region0: #{net_forward.3}
  #allocation0 [shape = 'u32[]', space=smem, size = 0x4, offset = 0x4, fixed_abs, tag = 'smem constant byte address 0x4 - core index']
  #allocation1 [shape = 'u32[72,128]{1,0:T(1,128)}', space=vmem, size = 0x9000, scoped, tag = 'internal scratch']
  %s0 = inlined_call_operand.vmem [shape: bf16[2,800,128], index: 0, kind: input, shape index: {}]
  %s1 = inlined_call_operand.vmem [shape: bf16[128,128], index: 1, kind: input, shape index: {}]
  %s2 = inlined_call_operand.vmem [shape: f32[1,128], index: 2, kind: input, shape index: {}]
  %s3 = inlined_call_operand.vmem [shape: f32[2,200,8], index: 3, kind: output, shape index: {}]
  %s4 = sld [smem:[#allocation0]]
  $region45: #{net_forward.3} parent=0
    _
  %s6 = ssub.s32 1, %s4
  %s7 = scalar_select 0, %s6, %s4
  loop: start=0, step=1, limit=4
  $region2: #{net_forward.3} parent=0 // loop_pre_header
    _
  $region3: #{net_forward.3} parent=0 // loop_header
    %s9 = sphi 0, %s13
    %p10 = scmp.ge.s32.totalorder %s9, 4
    %s19 = sphi 0, %s21
    %s22 = sphi 0, %s19
    %s23 = sphi 0, %s22
    %s39 = sphi 0, %s23
    %s43 = sphi 0, %s43
    %s45 = sphi 0, %s43
    %s46 = sphi 0, %s45
    %s60 = sphi 0, %s46
    %s64 = sphi 0, %s64
    %s66 = sphi 0, %s64
    %s67 = sphi 0, %s66
    %s81 = sphi 0, %s67
    %s87 = sphi 0, %s89
    %s90 = sphi 0, %s87
    %s91 = sphi 0, %s90
    %s107 = sphi 0, %s91
  $region4: #{net_forward.3} parent=0 // loop_header_branch
    %12 = sbr.rel (%p10) target = $region8
  $region5: #{net_forward.3} parent=0 // loop_body
    %s14 = ssub.s32 %s9, 1
    %s15 = ssub.s32 %s9, 2
    %s16 = sadd.s32 %s9, 1
    %s17 = ssub.s32 %s9, %s16
    %p18 = scmp.eq.s32.totalorder %s17, 0
    %s20 = sadd.s32 %s19, 1
    %s21 = scalar_select %p18, %s19, %s20
    %p24 = pneg %p18
    %p25 = scmp.eq.s32.totalorder %s9, 1
    %p26 = por %p24, %p25
    %p27 = scmp.ne.s32.totalorder %s19, %s22
    %p28 = scmp.eq.s32.totalorder %s9, 0
    %p29 = por %p27, %p28
    %p30 = scmp.ne.s32.totalorder %s19, %s22
    %p31 = scmp.eq.s32.totalorder %s14, 1
    %p32 = por %p30, %p31
    %p33 = scmp.ne.s32.totalorder %s22, %s23
    %p34 = scmp.eq.s32.totalorder %s14, 0
    %p35 = por %p33, %p34
    %p36 = scmp.ne.s32.totalorder %s22, %s23
    %p37 = scmp.eq.s32.totalorder %s15, 1
    %p38 = por %p36, %p37
    %p40 = scmp.ne.s32.totalorder %s23, %s39
    %p41 = scmp.eq.s32.totalorder %s15, 0
    %p42 = por %p40, %p41
    %s44 = sadd.s32 %s43, 1
    %p47 = scmp.eq.s32.totalorder %s9, 1
    %p48 = scmp.ne.s32.totalorder %s43, %s45
    %p49 = scmp.eq.s32.totalorder %s9, 0
    %p50 = por %p48, %p49
    %p51 = scmp.ne.s32.totalorder %s43, %s45
    %p52 = scmp.eq.s32.totalorder %s14, 1
    %p53 = por %p51, %p52
    %p54 = scmp.ne.s32.totalorder %s45, %s46
    %p55 = scmp.eq.s32.totalorder %s14, 0
    %p56 = por %p54, %p55
    %p57 = scmp.ne.s32.totalorder %s45, %s46
    %p58 = scmp.eq.s32.totalorder %s15, 1
    %p59 = por %p57, %p58
    %p61 = scmp.ne.s32.totalorder %s46, %s60
    %p62 = scmp.eq.s32.totalorder %s15, 0
    %p63 = por %p61, %p62
    %s65 = sadd.s32 %s64, 1
    %p68 = scmp.eq.s32.totalorder %s9, 1
    %p69 = scmp.ne.s32.totalorder %s64, %s66
    %p70 = scmp.eq.s32.totalorder %s9, 0
    %p71 = por %p69, %p70
    %p72 = scmp.ne.s32.totalorder %s64, %s66
    %p73 = scmp.eq.s32.totalorder %s14, 1
    %p74 = por %p72, %p73
    %p75 = scmp.ne.s32.totalorder %s66, %s67
    %p76 = scmp.eq.s32.totalorder %s14, 0
    %p77 = por %p75, %p76
    %p78 = scmp.ne.s32.totalorder %s66, %s67
    %p79 = scmp.eq.s32.totalorder %s15, 1
    %p80 = por %p78, %p79
    %p82 = scmp.ne.s32.totalorder %s67, %s81
    %p83 = scmp.eq.s32.totalorder %s15, 0
    %p84 = por %p82, %p83
    %s85 = ssub.s32 %s9, %s16
    %p86 = scmp.eq.s32.totalorder %s85, 0
    %s88 = sadd.s32 %s87, 1
    %s89 = scalar_select %p86, %s87, %s88
    %p92 = pneg %p86
    %p93 = scmp.eq.s32.totalorder %s9, 1
    %p94 = por %p92, %p93
    %p95 = scmp.ne.s32.totalorder %s87, %s90
    %p96 = scmp.eq.s32.totalorder %s9, 0
    %p97 = por %p95, %p96
    %p98 = scmp.ne.s32.totalorder %s87, %s90
    %p99 = scmp.eq.s32.totalorder %s14, 1
    %p100 = por %p98, %p99
    %p101 = scmp.ne.s32.totalorder %s90, %s91
    %p102 = scmp.eq.s32.totalorder %s14, 0
    %p103 = por %p101, %p102
    %p104 = scmp.ne.s32.totalorder %s90, %s91
    %p105 = scmp.eq.s32.totalorder %s15, 1
    %p106 = por %p104, %p105
    %p108 = scmp.ne.s32.totalorder %s91, %s107
    %p109 = scmp.eq.s32.totalorder %s15, 0
    %p110 = por %p108, %p109
    %p111 = scmp.le.s32.totalorder 1, %s9
    %p112 = scmp.lt.s32.totalorder %s9, 3
    %p113 = pnand %p111, %p112
    %p114 = pneg %p113
    // Predicated region
    $region9: #{net_forward.3} parent=5 // pred_check
      _
    $region10: #{net_forward.3} parent=5 // pred_check_branch
      %116 = sbr.rel (%p113) target = $region12
    $region11: #{net_forward.3} parent=5 // pred_region
      %s117 = ssub.s32 %s9, 1
      // Predicated region
      $region13: #{net_forward.3} parent=11 // pred_check
        %p118 = pneg %p56
      $region14: #{net_forward.3} parent=11 // pred_check_branch
        %120 = sbr.rel (%p118) target = $region16
      $region15: #{net_forward.3} parent=11 // pred_region
        _
      $region16: #{net_forward.3} parent=11 // pred_fallthru
        _
      // Predicated region
      $region17: #{net_forward.3} parent=11 // pred_check
        %p121 = pneg %p77
      $region18: #{net_forward.3} parent=11 // pred_check_branch
        %123 = sbr.rel (%p121) target = $region20
      $region19: #{net_forward.3} parent=11 // pred_region
        _
      $region20: #{net_forward.3} parent=11 // pred_fallthru
        _
    $region12: #{net_forward.3} parent=5 // pred_fallthru
      _
    %p124 = scmp.lt.s32.totalorder %s9, 2
    // Predicated region
    $region21: #{net_forward.3} parent=5 // pred_check
      %p125 = pneg %p124
    $region22: #{net_forward.3} parent=5 // pred_check_branch
      %127 = sbr.rel (%p125) target = $region24
    $region23: #{net_forward.3} parent=5 // pred_region
      // Predicated region
      $region25: #{net_forward.3} parent=23 // pred_check
        %p128 = pneg %p29
      $region26: #{net_forward.3} parent=23 // pred_check_branch
        %130 = sbr.rel (%p128) target = $region28
      $region27: #{net_forward.3} parent=23 // pred_region
        %p131 = scmp.lt.s32.totalorder %s9, 1
        %s132 = scalar_select %p131, %s9, 1
        %s133 = smul.addr %s132, 100
        %s134 = smul.addr %s133, 4
        %s135 = scalar_lea.vmem %s0, %s134
      $region28: #{net_forward.3} parent=23 // pred_fallthru
        _
    $region24: #{net_forward.3} parent=5 // pred_fallthru
      _
    %p136 = scmp.le.s32.totalorder 1, %s9
    %p137 = scmp.lt.s32.totalorder %s9, 3
    %p138 = pnand %p136, %p137
    %p139 = pneg %p138
    // Predicated region
    $region29: #{net_forward.3} parent=5 // pred_check
      _
    $region30: #{net_forward.3} parent=5 // pred_check_branch
      %141 = sbr.rel (%p138) target = $region32
    $region31: #{net_forward.3} parent=5 // pred_region
      %s142 = ssub.s32 %s9, 1
      %p143 = scmp.lt.s32.totalorder %s14, 1
      %s144 = scalar_select %p143, %s14, 1
      %s145 = smul.addr %s144, 100
      %s146 = smul.addr %s145, 4
      %s147 = scalar_lea.vmem %s0, %s146
      %p148 = pneg %p35
      %p149 = pneg %p32
      %p150 = pneg %p56
      %p151 = pneg %p53
      %p152 = pneg %p77
      %p153 = pneg %p74
      %p154 = pneg %p103
      %p155 = pneg %p100
      %p156 = scmp.lt.s32.totalorder %s14, 1
      %s157 = scalar_select %p156, %s14, 1
      %s158 = smul.addr %s157, 25
      %s159 = smul.addr %s158, 8
      %s160 = scalar_lea.vmem %s3, %s159
      %p161 = scmp.lt.s32.totalorder %s14, 1
      %s162 = scalar_select %p161, %s14, 1
      %s163 = smul.addr %s162, 100
      %s164 = smul.addr %s163, 4
      %s165 = scalar_lea.vmem %s0, %s164
      %p166 = scmp.lt.s32.totalorder %s14, 1
      %s167 = scalar_select %p166, %s14, 1
      %s168 = smul.addr %s167, 25
      %s169 = smul.addr %s168, 8
      %s170 = scalar_lea.vmem %s3, %s169
      %v171 = vld [vmem:[%s165] sm:$0xf]
      %v172 = vld [vmem:[%s165 + $0x4] sm:$0xf]
      %v173 = vld [vmem:[%s165 + $0x8] sm:$0xf]
      %v174 = vld [vmem:[%s165 + $0xc] sm:$0xf]
      %v175 = vld [vmem:[%s165 + $0x10] sm:$0xf]
      %v176 = vld [vmem:[%s165 + $0x14] sm:$0xf]
      %v177 = vld [vmem:[%s165 + $0x18] sm:$0xf]
      %v178 = vld [vmem:[%s165 + $0x1c] sm:$0xf]
      %v179 = vld [vmem:[%s165 + $0x20] sm:$0xf]
      %v180 = vld [vmem:[%s165 + $0x24] sm:$0xf]
      %v181 = vld [vmem:[%s165 + $0x28] sm:$0xf]
      %v182 = vld [vmem:[%s165 + $0x2c] sm:$0xf]
      %v183 = vld [vmem:[%s165 + $0x30] sm:$0xf]
      %v184 = vld [vmem:[%s165 + $0x34] sm:$0xf]
      %v185 = vld [vmem:[%s165 + $0x38] sm:$0xf]
      %v186 = vld [vmem:[%s165 + $0x3c] sm:$0xf]
      %v187 = vld [vmem:[%s165 + $0x40] sm:$0xf]
      %v188 = vld [vmem:[%s165 + $0x44] sm:$0xf]
      %v189 = vld [vmem:[%s165 + $0x48] sm:$0xf]
      %v190 = vld [vmem:[%s165 + $0x4c] sm:$0xf]
      %v191 = vld [vmem:[%s165 + $0x50] sm:$0xf]
      %v192 = vld [vmem:[%s165 + $0x54] sm:$0xf]
      %v193 = vld [vmem:[%s165 + $0x58] sm:$0xf]
      %v194 = vld [vmem:[%s165 + $0x5c] sm:$0xf]
      %v195 = vld [vmem:[%s165 + $0x60] sm:$0xf]
      %v196 = vld [vmem:[%s165 + $0x64] sm:$0xf]
      %v197 = vld [vmem:[%s165 + $0x68] sm:$0xf]
      %v198 = vld [vmem:[%s165 + $0x6c] sm:$0xf]
      %v199 = vld [vmem:[%s165 + $0x70] sm:$0xf]
      %v200 = vld [vmem:[%s165 + $0x74] sm:$0xf]
      %v201 = vld [vmem:[%s165 + $0x78] sm:$0xf]
      %v202 = vld [vmem:[%s165 + $0x7c] sm:$0xf]
      %v203 = vld [vmem:[%s165 + $0x80] sm:$0xf]
      %v204 = vld [vmem:[%s165 + $0x84] sm:$0xf]
      %v205 = vld [vmem:[%s165 + $0x88] sm:$0xf]
      %v206 = vld [vmem:[%s165 + $0x8c] sm:$0xf]
      %v207 = vld [vmem:[%s165 + $0x90] sm:$0xf]
      %v208 = vld [vmem:[%s165 + $0x94] sm:$0xf]
      %v209 = vld [vmem:[%s165 + $0x98] sm:$0xf]
      %v210 = vld [vmem:[%s165 + $0x9c] sm:$0xf]
      %v211 = vld [vmem:[%s165 + $0xa0] sm:$0xf]
      %v212 = vld [vmem:[%s165 + $0xa4] sm:$0xf]
      %v213 = vld [vmem:[%s165 + $0xa8] sm:$0xf]
      %v214 = vld [vmem:[%s165 + $0xac] sm:$0xf]
      %v215 = vld [vmem:[%s165 + $0xb0] sm:$0xf]
      %v216 = vld [vmem:[%s165 + $0xb4] sm:$0xf]
      %v217 = vld [vmem:[%s165 + $0xb8] sm:$0xf]
      %v218 = vld [vmem:[%s165 + $0xbc] sm:$0xf]
      %v219 = vld [vmem:[%s165 + $0xc0] sm:$0xf]
      %v220 = vld [vmem:[%s165 + $0xc4] sm:$0xf]
      %v221 = vld [vmem:[%s165 + $0xc8] sm:$0xf]
      %v222 = vld [vmem:[%s165 + $0xcc] sm:$0xf]
      %v223 = vld [vmem:[%s165 + $0xd0] sm:$0xf]
      %v224 = vld [vmem:[%s165 + $0xd4] sm:$0xf]
      %v225 = vld [vmem:[%s165 + $0xd8] sm:$0xf]
      %v226 = vld [vmem:[%s165 + $0xdc] sm:$0xf]
      %v227 = vld [vmem:[%s165 + $0xe0] sm:$0xf]
      %v228 = vld [vmem:[%s165 + $0xe4] sm:$0xf]
      %v229 = vld [vmem:[%s165 + $0xe8] sm:$0xf]
      %v230 = vld [vmem:[%s165 + $0xec] sm:$0xf]
      %v231 = vld [vmem:[%s165 + $0xf0] sm:$0xf]
      %v232 = vld [vmem:[%s165 + $0xf4] sm:$0xf]
      %v233 = vld [vmem:[%s165 + $0xf8] sm:$0xf]
      %v234 = vld [vmem:[%s165 + $0xfc] sm:$0xf]
      %v235 = vld [vmem:[%s165 + $0x100] sm:$0xf]
      %v236 = vld [vmem:[%s165 + $0x104] sm:$0xf]
      %v237 = vld [vmem:[%s165 + $0x108] sm:$0xf]
      %v238 = vld [vmem:[%s165 + $0x10c] sm:$0xf]
      %v239 = vld [vmem:[%s165 + $0x110] sm:$0xf]
      %v240 = vld [vmem:[%s165 + $0x114] sm:$0xf]
      %v241 = vld [vmem:[%s165 + $0x118] sm:$0xf]
      %v242 = vld [vmem:[%s165 + $0x11c] sm:$0xf]
      %v243 = vld [vmem:[%s165 + $0x120] sm:$0xf]
      %v244 = vld [vmem:[%s165 + $0x124] sm:$0xf]
      %v245 = vld [vmem:[%s165 + $0x128] sm:$0xf]
      %v246 = vld [vmem:[%s165 + $0x12c] sm:$0xf]
      %v247 = vld [vmem:[%s165 + $0x130] sm:$0xf]
      %v248 = vld [vmem:[%s165 + $0x134] sm:$0xf]
      %v249 = vld [vmem:[%s165 + $0x138] sm:$0xf]
      %v250 = vld [vmem:[%s165 + $0x13c] sm:$0xf]
      %v251 = vld [vmem:[%s165 + $0x140] sm:$0xf]
      %v252 = vld [vmem:[%s165 + $0x144] sm:$0xf]
      %v253 = vld [vmem:[%s165 + $0x148] sm:$0xf]
      %v254 = vld [vmem:[%s165 + $0x14c] sm:$0xf]
      %v255 = vld [vmem:[%s165 + $0x150] sm:$0xf]
      %v256 = vld [vmem:[%s165 + $0x154] sm:$0xf]
      %v257 = vld [vmem:[%s165 + $0x158] sm:$0xf]
      %v258 = vld [vmem:[%s165 + $0x15c] sm:$0xf]
      %v259 = vld [vmem:[%s165 + $0x160] sm:$0xf]
      %v260 = vld [vmem:[%s165 + $0x164] sm:$0xf]
      %v261 = vld [vmem:[%s165 + $0x168] sm:$0xf]
      %v262 = vld [vmem:[%s165 + $0x16c] sm:$0xf]
      %v263 = vld [vmem:[%s165 + $0x170] sm:$0xf]
      %v264 = vld [vmem:[%s165 + $0x174] sm:$0xf]
      %v265 = vld [vmem:[%s165 + $0x178] sm:$0xf]
      %v266 = vld [vmem:[%s165 + $0x17c] sm:$0xf]
      %v267 = vld [vmem:[%s165 + $0x180] sm:$0xf]
      %v268 = vld [vmem:[%s165 + $0x184] sm:$0xf]
      %v269 = vld [vmem:[%s165 + $0x188] sm:$0xf]
      %v270 = vld [vmem:[%s165 + $0x18c] sm:$0xf]
      %v271 = vld [vmem:[%s1] sm:$0xf]
      %v272 = vld [vmem:[%s1 + $0x4] sm:$0xf]
      %v273 = vld [vmem:[%s1 + $0x8] sm:$0xf]
      %v274 = vld [vmem:[%s1 + $0xc] sm:$0xf]
      %v275 = vld [vmem:[%s1 + $0x10] sm:$0xf]
      %v276 = vld [vmem:[%s1 + $0x14] sm:$0xf]
      %v277 = vld [vmem:[%s1 + $0x18] sm:$0xf]
      %v278 = vld [vmem:[%s1 + $0x1c] sm:$0xf]
      %v279 = vld [vmem:[%s1 + $0x20] sm:$0xf]
      %v280 = vld [vmem:[%s1 + $0x24] sm:$0xf]
      %v281 = vld [vmem:[%s1 + $0x28] sm:$0xf]
      %v282 = vld [vmem:[%s1 + $0x2c] sm:$0xf]
      %v283 = vld [vmem:[%s1 + $0x30] sm:$0xf]
      %v284 = vld [vmem:[%s1 + $0x34] sm:$0xf]
      %v285 = vld [vmem:[%s1 + $0x38] sm:$0xf]
      %v286 = vld [vmem:[%s1 + $0x3c] sm:$0xf]
      %v287 = vld [vmem:[%s2] sm:$0x1]
      %v289 = vperm.slane %v287, 0
      %v391 = vunpack.c.l.b16 %v171
      %v392 = vunpack.c.l.b16 %v172
      %v393 = vunpack.c.l.b16 %v173
      %v394 = vunpack.c.l.b16 %v174
      %v395 = vunpack.c.l.b16 %v175
      %v396 = vunpack.c.l.b16 %v176
      %v397 = vunpack.c.l.b16 %v177
      %v398 = vunpack.c.l.b16 %v178
      %v399 = vunpack.c.l.b16 %v179
      %v400 = vunpack.c.l.b16 %v180
      %v401 = vunpack.c.l.b16 %v181
      %v402 = vunpack.c.l.b16 %v182
      %v403 = vunpack.c.l.b16 %v183
      %v404 = vunpack.c.l.b16 %v184
      %v405 = vunpack.c.l.b16 %v185
      %v406 = vunpack.c.l.b16 %v186
      %v407 = vunpack.c.l.b16 %v187
      %v408 = vunpack.c.l.b16 %v188
      %v409 = vunpack.c.l.b16 %v189
      %v410 = vunpack.c.l.b16 %v190
      %v411 = vunpack.c.l.b16 %v191
      %v412 = vunpack.c.l.b16 %v192
      %v413 = vunpack.c.l.b16 %v193
      %v414 = vunpack.c.l.b16 %v194
      %v415 = vunpack.c.l.b16 %v195
      %v416 = vunpack.c.l.b16 %v196
      %v417 = vunpack.c.l.b16 %v197
      %v418 = vunpack.c.l.b16 %v198
      %v419 = vunpack.c.l.b16 %v199
      %v420 = vunpack.c.l.b16 %v200
      %v421 = vunpack.c.l.b16 %v201
      %v422 = vunpack.c.l.b16 %v202
      %v423 = vunpack.c.l.b16 %v203
      %v424 = vunpack.c.l.b16 %v204
      %v425 = vunpack.c.l.b16 %v205
      %v426 = vunpack.c.l.b16 %v206
      %v427 = vunpack.c.l.b16 %v207
      %v428 = vunpack.c.l.b16 %v208
      %v429 = vunpack.c.l.b16 %v209
      %v430 = vunpack.c.l.b16 %v210
      %v431 = vunpack.c.l.b16 %v211
      %v432 = vunpack.c.l.b16 %v212
      %v433 = vunpack.c.l.b16 %v213
      %v434 = vunpack.c.l.b16 %v214
      %v435 = vunpack.c.l.b16 %v215
      %v436 = vunpack.c.l.b16 %v216
      %v437 = vunpack.c.l.b16 %v217
      %v438 = vunpack.c.l.b16 %v218
      %v439 = vunpack.c.l.b16 %v219
      %v440 = vunpack.c.l.b16 %v220
      %v441 = vunpack.c.l.b16 %v221
      %v442 = vunpack.c.l.b16 %v222
      %v443 = vunpack.c.l.b16 %v223
      %v444 = vunpack.c.l.b16 %v224
      %v445 = vunpack.c.l.b16 %v225
      %v446 = vunpack.c.l.b16 %v226
      %v447 = vunpack.c.l.b16 %v227
      %v448 = vunpack.c.l.b16 %v228
      %v449 = vunpack.c.l.b16 %v229
      %v450 = vunpack.c.l.b16 %v230
      %v451 = vunpack.c.l.b16 %v231
      %v452 = vunpack.c.l.b16 %v232
      %v453 = vunpack.c.l.b16 %v233
      %v454 = vunpack.c.l.b16 %v234
      %v455 = vunpack.c.l.b16 %v235
      %v456 = vunpack.c.l.b16 %v236
      %v457 = vunpack.c.l.b16 %v237
      %v458 = vunpack.c.l.b16 %v238
      %v459 = vunpack.c.l.b16 %v239
      %v460 = vunpack.c.l.b16 %v240
      %v461 = vunpack.c.l.b16 %v241
      %v462 = vunpack.c.l.b16 %v242
      %v463 = vunpack.c.l.b16 %v243
      %v464 = vunpack.c.l.b16 %v244
      %v465 = vunpack.c.l.b16 %v245
      %v466 = vunpack.c.l.b16 %v246
      %v467 = vunpack.c.l.b16 %v247
      %v468 = vunpack.c.l.b16 %v248
      %v469 = vunpack.c.l.b16 %v249
      %v470 = vunpack.c.l.b16 %v250
      %v471 = vunpack.c.l.b16 %v251
      %v472 = vunpack.c.l.b16 %v252
      %v473 = vunpack.c.l.b16 %v253
      %v474 = vunpack.c.l.b16 %v254
      %v475 = vunpack.c.l.b16 %v255
      %v476 = vunpack.c.l.b16 %v256
      %v477 = vunpack.c.l.b16 %v257
      %v478 = vunpack.c.l.b16 %v258
      %v479 = vunpack.c.l.b16 %v259
      %v480 = vunpack.c.l.b16 %v260
      %v481 = vunpack.c.l.b16 %v261
      %v482 = vunpack.c.l.b16 %v262
      %v483 = vunpack.c.l.b16 %v263
      %v484 = vunpack.c.l.b16 %v264
      %v485 = vunpack.c.l.b16 %v265
      %v486 = vunpack.c.l.b16 %v266
      %v487 = vunpack.c.l.b16 %v267
      %v488 = vunpack.c.l.b16 %v268
      %v489 = vunpack.c.l.b16 %v269
      %v490 = vunpack.c.l.b16 %v270
      %v491 = vpack.c.b16 %v392, %v391
      %v492 = vpack.c.b16 %v394, %v393
      %v493 = vpack.c.b16 %v396, %v395
      %v494 = vpack.c.b16 %v398, %v397
      %v495 = vpack.c.b16 %v400, %v399
      %v496 = vpack.c.b16 %v402, %v401
      %v497 = vpack.c.b16 %v404, %v403
      %v498 = vpack.c.b16 %v406, %v405
      %v499 = vpack.c.b16 %v408, %v407
      %v500 = vpack.c.b16 %v410, %v409
      %v501 = vpack.c.b16 %v412, %v411
      %v502 = vpack.c.b16 %v414, %v413
      %v503 = vpack.c.b16 %v416, %v415
      %v504 = vpack.c.b16 %v418, %v417
      %v505 = vpack.c.b16 %v420, %v419
      %v506 = vpack.c.b16 %v422, %v421
      %v507 = vpack.c.b16 %v424, %v423
      %v508 = vpack.c.b16 %v426, %v425
      %v509 = vpack.c.b16 %v428, %v427
      %v510 = vpack.c.b16 %v430, %v429
      %v511 = vpack.c.b16 %v432, %v431
      %v512 = vpack.c.b16 %v434, %v433
      %v513 = vpack.c.b16 %v436, %v435
      %v514 = vpack.c.b16 %v438, %v437
      %v515 = vpack.c.b16 %v440, %v439
      %v516 = vpack.c.b16 %v442, %v441
      %v517 = vpack.c.b16 %v444, %v443
      %v518 = vpack.c.b16 %v446, %v445
      %v519 = vpack.c.b16 %v448, %v447
      %v520 = vpack.c.b16 %v450, %v449
      %v521 = vpack.c.b16 %v452, %v451
      %v522 = vpack.c.b16 %v454, %v453
      %v523 = vpack.c.b16 %v456, %v455
      %v524 = vpack.c.b16 %v458, %v457
      %v525 = vpack.c.b16 %v460, %v459
      %v526 = vpack.c.b16 %v462, %v461
      %v527 = vpack.c.b16 %v464, %v463
      %v528 = vpack.c.b16 %v466, %v465
      %v529 = vpack.c.b16 %v468, %v467
      %v530 = vpack.c.b16 %v470, %v469
      %v531 = vpack.c.b16 %v472, %v471
      %v532 = vpack.c.b16 %v474, %v473
      %v533 = vpack.c.b16 %v476, %v475
      %v534 = vpack.c.b16 %v478, %v477
      %v535 = vpack.c.b16 %v480, %v479
      %v536 = vpack.c.b16 %v482, %v481
      %v537 = vpack.c.b16 %v484, %v483
      %v538 = vpack.c.b16 %v486, %v485
      %v539 = vpack.c.b16 %v488, %v487
      %v540 = vpack.c.b16 %v490, %v489
      %v607 = vunpack.c.l.b16 %v271
      %v608 = vunpack.c.l.b16 %v272
      %v609 = vunpack.c.l.b16 %v273
      %v610 = vunpack.c.l.b16 %v274
      %v611 = vunpack.c.l.b16 %v275
      %v612 = vunpack.c.l.b16 %v276
      %v613 = vunpack.c.l.b16 %v277
      %v614 = vunpack.c.l.b16 %v278
      %v615 = vunpack.c.l.b16 %v279
      %v616 = vunpack.c.l.b16 %v280
      %v617 = vunpack.c.l.b16 %v281
      %v618 = vunpack.c.l.b16 %v282
      %v619 = vunpack.c.l.b16 %v283
      %v620 = vunpack.c.l.b16 %v284
      %v621 = vunpack.c.l.b16 %v285
      %v622 = vunpack.c.l.b16 %v286
      %v623 = vpack.c.b16 %v608, %v607
      %v624 = vpack.c.b16 %v610, %v609
      %v625 = vpack.c.b16 %v612, %v611
      %v626 = vpack.c.b16 %v614, %v613
      %v627 = vpack.c.b16 %v616, %v615
      %v628 = vpack.c.b16 %v618, %v617
      %v629 = vpack.c.b16 %v620, %v619
      %v630 = vpack.c.b16 %v622, %v621
      %639 = vmatpush.bf16.msra.mxu0 %v630
      %640 = vmatpush.bf16.msra.mxu0 %v629
      %641 = vmatpush.bf16.msra.mxu0 %v628
      %642 = vmatpush.bf16.msra.mxu0 %v627
      %643 = vmatpush.bf16.msra.mxu0 %v626
      %644 = vmatpush.bf16.msra.mxu0 %v625
      %645 = vmatpush.bf16.msra.mxu0 %v624
      %646 = vmatpush.bf16.msra.mxu0 %v623
      %647 = vmatmul.bf16.gmra.mxu0 %v491
      %v648 = vpop.f32.mrf.mxu0
      %v649 = vadd.f32 %v289, %v648
      %v650 = vpop.f32.mrf.mxu0
      %v651 = vadd.f32 %v289, %v650
      %652 = vmatmul.bf16.gmra.mxu0 %v492
      %v653 = vpop.f32.mrf.mxu0
      %v654 = vadd.f32 %v289, %v653
      %v655 = vpop.f32.mrf.mxu0
      %v656 = vadd.f32 %v289, %v655
      %657 = vmatmul.bf16.gmra.mxu0 %v493
      %v658 = vpop.f32.mrf.mxu0
      %v659 = vadd.f32 %v289, %v658
      %v660 = vpop.f32.mrf.mxu0
      %v661 = vadd.f32 %v289, %v660
      %662 = vmatmul.bf16.gmra.mxu0 %v494
      %v663 = vpop.f32.mrf.mxu0
      %v664 = vadd.f32 %v289, %v663
      %v665 = vpop.f32.mrf.mxu0
      %v666 = vadd.f32 %v289, %v665
      %667 = vmatmul.bf16.gmra.mxu0 %v495
      %v668 = vpop.f32.mrf.mxu0
      %v669 = vadd.f32 %v289, %v668
      %v670 = vpop.f32.mrf.mxu0
      %v671 = vadd.f32 %v289, %v670
      %672 = vmatmul.bf16.gmra.mxu0 %v496
      %v673 = vpop.f32.mrf.mxu0
      %v674 = vadd.f32 %v289, %v673
      %v675 = vpop.f32.mrf.mxu0
      %v676 = vadd.f32 %v289, %v675
      %677 = vmatmul.bf16.gmra.mxu0 %v497
      %v678 = vpop.f32.mrf.mxu0
      %v679 = vadd.f32 %v289, %v678
      %v680 = vpop.f32.mrf.mxu0
      %v681 = vadd.f32 %v289, %v680
      %682 = vmatmul.bf16.gmra.mxu0 %v498
      %v683 = vpop.f32.mrf.mxu0
      %v684 = vadd.f32 %v289, %v683
      %v685 = vpop.f32.mrf.mxu0
      %v686 = vadd.f32 %v289, %v685
      %687 = vmatmul.bf16.gmra.mxu0 %v499
      %v688 = vpop.f32.mrf.mxu0
      %v689 = vadd.f32 %v289, %v688
      %v690 = vpop.f32.mrf.mxu0
      %v691 = vadd.f32 %v289, %v690
      %692 = vmatmul.bf16.gmra.mxu0 %v500
      %v693 = vpop.f32.mrf.mxu0
      %v694 = vadd.f32 %v289, %v693
      %v695 = vpop.f32.mrf.mxu0
      %v696 = vadd.f32 %v289, %v695
      %697 = vmatmul.bf16.gmra.mxu0 %v501
      %v698 = vpop.f32.mrf.mxu0
      %v699 = vadd.f32 %v289, %v698
      %v700 = vpop.f32.mrf.mxu0
      %v701 = vadd.f32 %v289, %v700
      %702 = vmatmul.bf16.gmra.mxu0 %v502
      %v703 = vpop.f32.mrf.mxu0
      %v704 = vadd.f32 %v289, %v703
      %v705 = vpop.f32.mrf.mxu0
      %v706 = vadd.f32 %v289, %v705
      %707 = vmatmul.bf16.gmra.mxu0 %v503
      %v708 = vpop.f32.mrf.mxu0
      %v709 = vadd.f32 %v289, %v708
      %v710 = vpop.f32.mrf.mxu0
      %v711 = vadd.f32 %v289, %v710
      %712 = vmatmul.bf16.gmra.mxu0 %v504
      %v713 = vpop.f32.mrf.mxu0
      %v714 = vadd.f32 %v289, %v713
      %v715 = vpop.f32.mrf.mxu0
      %v716 = vadd.f32 %v289, %v715
      %717 = vmatmul.bf16.gmra.mxu0 %v505
      %v718 = vpop.f32.mrf.mxu0
      %v719 = vadd.f32 %v289, %v718
      %v720 = vpop.f32.mrf.mxu0
      %v721 = vadd.f32 %v289, %v720
      %722 = vmatmul.bf16.gmra.mxu0 %v506
      %v723 = vpop.f32.mrf.mxu0
      %v724 = vadd.f32 %v289, %v723
      %v725 = vpop.f32.mrf.mxu0
      %v726 = vadd.f32 %v289, %v725
      %727 = vmatmul.bf16.gmra.mxu0 %v507
      %v728 = vpop.f32.mrf.mxu0
      %v729 = vadd.f32 %v289, %v728
      %v730 = vpop.f32.mrf.mxu0
      %v731 = vadd.f32 %v289, %v730
      %732 = vmatmul.bf16.gmra.mxu0 %v508
      %v733 = vpop.f32.mrf.mxu0
      %v734 = vadd.f32 %v289, %v733
      %v735 = vpop.f32.mrf.mxu0
      %v736 = vadd.f32 %v289, %v735
      %737 = vmatmul.bf16.gmra.mxu0 %v509
      %v738 = vpop.f32.mrf.mxu0
      %v739 = vadd.f32 %v289, %v738
      %v740 = vpop.f32.mrf.mxu0
      %v741 = vadd.f32 %v289, %v740
      %742 = vmatmul.bf16.gmra.mxu0 %v510
      %v743 = vpop.f32.mrf.mxu0
      %v744 = vadd.f32 %v289, %v743
      %v745 = vpop.f32.mrf.mxu0
      %v746 = vadd.f32 %v289, %v745
      %747 = vmatmul.bf16.gmra.mxu0 %v511
      %v748 = vpop.f32.mrf.mxu0
      %v749 = vadd.f32 %v289, %v748
      %v750 = vpop.f32.mrf.mxu0
      %v751 = vadd.f32 %v289, %v750
      %752 = vmatmul.bf16.gmra.mxu0 %v512
      %v753 = vpop.f32.mrf.mxu0
      %v754 = vadd.f32 %v289, %v753
      %v755 = vpop.f32.mrf.mxu0
      %v756 = vadd.f32 %v289, %v755
      %757 = vmatmul.bf16.gmra.mxu0 %v513
      %v758 = vpop.f32.mrf.mxu0
      %v759 = vadd.f32 %v289, %v758
      %v760 = vpop.f32.mrf.mxu0
      %v761 = vadd.f32 %v289, %v760
      %762 = vmatmul.bf16.gmra.mxu0 %v514
      %v763 = vpop.f32.mrf.mxu0
      %v764 = vadd.f32 %v289, %v763
      %v765 = vpop.f32.mrf.mxu0
      %v766 = vadd.f32 %v289, %v765
      %767 = vmatmul.bf16.gmra.mxu0 %v515
      %v768 = vpop.f32.mrf.mxu0
      %v769 = vadd.f32 %v289, %v768
      %v770 = vpop.f32.mrf.mxu0
      %v771 = vadd.f32 %v289, %v770
      %772 = vmatmul.bf16.gmra.mxu0 %v516
      %v773 = vpop.f32.mrf.mxu0
      %v774 = vadd.f32 %v289, %v773
      %v775 = vpop.f32.mrf.mxu0
      %v776 = vadd.f32 %v289, %v775
      %777 = vmatmul.bf16.gmra.mxu0 %v517
      %v778 = vpop.f32.mrf.mxu0
      %v779 = vadd.f32 %v289, %v778
      %v780 = vpop.f32.mrf.mxu0
      %v781 = vadd.f32 %v289, %v780
      %782 = vmatmul.bf16.gmra.mxu0 %v518
      %v783 = vpop.f32.mrf.mxu0
      %v784 = vadd.f32 %v289, %v783
      %v785 = vpop.f32.mrf.mxu0
      %v786 = vadd.f32 %v289, %v785
      %787 = vmatmul.bf16.gmra.mxu0 %v519
      %v788 = vpop.f32.mrf.mxu0
      %v789 = vadd.f32 %v289, %v788
      %v790 = vpop.f32.mrf.mxu0
      %v791 = vadd.f32 %v289, %v790
      %792 = vmatmul.bf16.gmra.mxu0 %v520
      %v793 = vpop.f32.mrf.mxu0
      %v794 = vadd.f32 %v289, %v793
      %v795 = vpop.f32.mrf.mxu0
      %v796 = vadd.f32 %v289, %v795
      %797 = vmatmul.bf16.gmra.mxu0 %v521
      %v798 = vpop.f32.mrf.mxu0
      %v799 = vadd.f32 %v289, %v798
      %v800 = vpop.f32.mrf.mxu0
      %v801 = vadd.f32 %v289, %v800
      %802 = vmatmul.bf16.gmra.mxu0 %v522
      %v803 = vpop.f32.mrf.mxu0
      %v804 = vadd.f32 %v289, %v803
      %v805 = vpop.f32.mrf.mxu0
      %v806 = vadd.f32 %v289, %v805
      %807 = vmatmul.bf16.gmra.mxu0 %v523
      %v808 = vpop.f32.mrf.mxu0
      %v809 = vadd.f32 %v289, %v808
      %v810 = vpop.f32.mrf.mxu0
      %v811 = vadd.f32 %v289, %v810
      %812 = vmatmul.bf16.gmra.mxu0 %v524
      %v813 = vpop.f32.mrf.mxu0
      %v814 = vadd.f32 %v289, %v813
      %v815 = vpop.f32.mrf.mxu0
      %v816 = vadd.f32 %v289, %v815
      %817 = vmatmul.bf16.gmra.mxu0 %v525
      %v818 = vpop.f32.mrf.mxu0
      %v819 = vadd.f32 %v289, %v818
      %v820 = vpop.f32.mrf.mxu0
      %v821 = vadd.f32 %v289, %v820
      %822 = vmatmul.bf16.gmra.mxu0 %v526
      %v823 = vpop.f32.mrf.mxu0
      %v824 = vadd.f32 %v289, %v823
      %v825 = vpop.f32.mrf.mxu0
      %v826 = vadd.f32 %v289, %v825
      %827 = vmatmul.bf16.gmra.mxu0 %v527
      %v828 = vpop.f32.mrf.mxu0
      %v829 = vadd.f32 %v289, %v828
      %v830 = vpop.f32.mrf.mxu0
      %v831 = vadd.f32 %v289, %v830
      %832 = vmatmul.bf16.gmra.mxu0 %v528
      %v833 = vpop.f32.mrf.mxu0
      %v834 = vadd.f32 %v289, %v833
      %v835 = vpop.f32.mrf.mxu0
      %v836 = vadd.f32 %v289, %v835
      %837 = vmatmul.bf16.gmra.mxu0 %v529
      %v838 = vpop.f32.mrf.mxu0
      %v839 = vadd.f32 %v289, %v838
      %v840 = vpop.f32.mrf.mxu0
      %v841 = vadd.f32 %v289, %v840
      %842 = vmatmul.bf16.gmra.mxu0 %v530
      %v843 = vpop.f32.mrf.mxu0
      %v844 = vadd.f32 %v289, %v843
      %v845 = vpop.f32.mrf.mxu0
      %v846 = vadd.f32 %v289, %v845
      %847 = vmatmul.bf16.gmra.mxu0 %v531
      %v848 = vpop.f32.mrf.mxu0
      %v849 = vadd.f32 %v289, %v848
      %v850 = vpop.f32.mrf.mxu0
      %v851 = vadd.f32 %v289, %v850
      %852 = vmatmul.bf16.gmra.mxu0 %v532
      %v853 = vpop.f32.mrf.mxu0
      %v854 = vadd.f32 %v289, %v853
      %v855 = vpop.f32.mrf.mxu0
      %v856 = vadd.f32 %v289, %v855
      %857 = vmatmul.bf16.gmra.mxu0 %v533
      %v858 = vpop.f32.mrf.mxu0
      %v859 = vadd.f32 %v289, %v858
      %v860 = vpop.f32.mrf.mxu0
      %v861 = vadd.f32 %v289, %v860
      %862 = vmatmul.bf16.gmra.mxu0 %v534
      %v863 = vpop.f32.mrf.mxu0
      %v864 = vadd.f32 %v289, %v863
      %v865 = vpop.f32.mrf.mxu0
      %v866 = vadd.f32 %v289, %v865
      %867 = vmatmul.bf16.gmra.mxu0 %v535
      %v868 = vpop.f32.mrf.mxu0
      %v869 = vadd.f32 %v289, %v868
      %v870 = vpop.f32.mrf.mxu0
      %v871 = vadd.f32 %v289, %v870
      %872 = vmatmul.bf16.gmra.mxu0 %v536
      %v873 = vpop.f32.mrf.mxu0
      %v874 = vadd.f32 %v289, %v873
      %v875 = vpop.f32.mrf.mxu0
      %v876 = vadd.f32 %v289, %v875
      %877 = vmatmul.bf16.gmra.mxu0 %v537
      %v878 = vpop.f32.mrf.mxu0
      %v879 = vadd.f32 %v289, %v878
      %v880 = vpop.f32.mrf.mxu0
      %v881 = vadd.f32 %v289, %v880
      %882 = vmatmul.bf16.gmra.mxu0 %v538
      %v883 = vpop.f32.mrf.mxu0
      %v884 = vadd.f32 %v289, %v883
      %v885 = vpop.f32.mrf.mxu0
      %v886 = vadd.f32 %v289, %v885
      %887 = vmatmul.bf16.gmra.mxu0 %v539
      %v888 = vpop.f32.mrf.mxu0
      %v889 = vadd.f32 %v289, %v888
      %v890 = vpop.f32.mrf.mxu0
      %v891 = vadd.f32 %v289, %v890
      %892 = vmatmul.bf16.gmra.mxu0 %v540
      %v893 = vpop.f32.mrf.mxu0
      %v894 = vadd.f32 %v289, %v893
      %v895 = vpop.f32.mrf.mxu0
      %v896 = vadd.f32 %v289, %v895
      %897 = vdwg.mxu0
      %v898 = vmax.f32 %v649, 0.0
      %v899 = vmax.f32 %v651, 0.0
      %v900 = vmax.f32 %v654, 0.0
      %v901 = vmax.f32 %v656, 0.0
      %v902 = vmax.f32 %v659, 0.0
      %v903 = vmax.f32 %v661, 0.0
      %v904 = vmax.f32 %v664, 0.0
      %v905 = vmax.f32 %v666, 0.0
      %v906 = vmax.f32 %v669, 0.0
      %v907 = vmax.f32 %v671, 0.0
      %v908 = vmax.f32 %v674, 0.0
      %v909 = vmax.f32 %v676, 0.0
      %v910 = vmax.f32 %v679, 0.0
      %v911 = vmax.f32 %v681, 0.0
      %v912 = vmax.f32 %v684, 0.0
      %v913 = vmax.f32 %v686, 0.0
      %v914 = vmax.f32 %v689, 0.0
      %v915 = vmax.f32 %v691, 0.0
      %v916 = vmax.f32 %v694, 0.0
      %v917 = vmax.f32 %v696, 0.0
      %v918 = vmax.f32 %v699, 0.0
      %v919 = vmax.f32 %v701, 0.0
      %v920 = vmax.f32 %v704, 0.0
      %v921 = vmax.f32 %v706, 0.0
      %v922 = vmax.f32 %v709, 0.0
      %v923 = vmax.f32 %v711, 0.0
      %v924 = vmax.f32 %v714, 0.0
      %v925 = vmax.f32 %v716, 0.0
      %v926 = vmax.f32 %v719, 0.0
      %v927 = vmax.f32 %v721, 0.0
      %v928 = vmax.f32 %v724, 0.0
      %v929 = vmax.f32 %v726, 0.0
      %v930 = vmax.f32 %v729, 0.0
      %v931 = vmax.f32 %v731, 0.0
      %v932 = vmax.f32 %v734, 0.0
      %v933 = vmax.f32 %v736, 0.0
      %v934 = vmax.f32 %v739, 0.0
      %v935 = vmax.f32 %v741, 0.0
      %v936 = vmax.f32 %v744, 0.0
      %v937 = vmax.f32 %v746, 0.0
      %v938 = vmax.f32 %v749, 0.0
      %v939 = vmax.f32 %v751, 0.0
      %v940 = vmax.f32 %v754, 0.0
      %v941 = vmax.f32 %v756, 0.0
      %v942 = vmax.f32 %v759, 0.0
      %v943 = vmax.f32 %v761, 0.0
      %v944 = vmax.f32 %v764, 0.0
      %v945 = vmax.f32 %v766, 0.0
      %v946 = vmax.f32 %v769, 0.0
      %v947 = vmax.f32 %v771, 0.0
      %v948 = vmax.f32 %v774, 0.0
      %v949 = vmax.f32 %v776, 0.0
      %v950 = vmax.f32 %v779, 0.0
      %v951 = vmax.f32 %v781, 0.0
      %v952 = vmax.f32 %v784, 0.0
      %v953 = vmax.f32 %v786, 0.0
      %v954 = vmax.f32 %v789, 0.0
      %v955 = vmax.f32 %v791, 0.0
      %v956 = vmax.f32 %v794, 0.0
      %v957 = vmax.f32 %v796, 0.0
      %v958 = vmax.f32 %v799, 0.0
      %v959 = vmax.f32 %v801, 0.0
      %v960 = vmax.f32 %v804, 0.0
      %v961 = vmax.f32 %v806, 0.0
      %v962 = vmax.f32 %v809, 0.0
      %v963 = vmax.f32 %v811, 0.0
      %v964 = vmax.f32 %v814, 0.0
      %v965 = vmax.f32 %v816, 0.0
      %v966 = vmax.f32 %v819, 0.0
      %v967 = vmax.f32 %v821, 0.0
      %v968 = vmax.f32 %v824, 0.0
      %v969 = vmax.f32 %v826, 0.0
      %v970 = vmax.f32 %v829, 0.0
      %v971 = vmax.f32 %v831, 0.0
      %v972 = vmax.f32 %v834, 0.0
      %v973 = vmax.f32 %v836, 0.0
      %v974 = vmax.f32 %v839, 0.0
      %v975 = vmax.f32 %v841, 0.0
      %v976 = vmax.f32 %v844, 0.0
      %v977 = vmax.f32 %v846, 0.0
      %v978 = vmax.f32 %v849, 0.0
      %v979 = vmax.f32 %v851, 0.0
      %v980 = vmax.f32 %v854, 0.0
      %v981 = vmax.f32 %v856, 0.0
      %v982 = vmax.f32 %v859, 0.0
      %v983 = vmax.f32 %v861, 0.0
      %v984 = vmax.f32 %v864, 0.0
      %v985 = vmax.f32 %v866, 0.0
      %v986 = vmax.f32 %v869, 0.0
      %v987 = vmax.f32 %v871, 0.0
      %v988 = vmax.f32 %v874, 0.0
      %v989 = vmax.f32 %v876, 0.0
      %v990 = vmax.f32 %v879, 0.0
      %v991 = vmax.f32 %v881, 0.0
      %v992 = vmax.f32 %v884, 0.0
      %v993 = vmax.f32 %v886, 0.0
      %v994 = vmax.f32 %v889, 0.0
      %v995 = vmax.f32 %v891, 0.0
      %v996 = vmax.f32 %v894, 0.0
      %v997 = vmax.f32 %v896, 0.0
      %v998 = vmax.f32 %v898, %v923
      %v999 = vmax.f32 %v899, %v924
      %v1000 = vmax.f32 %v900, %v925
      %v1001 = vmax.f32 %v901, %v926
      %v1002 = vmax.f32 %v902, %v927
      %v1003 = vmax.f32 %v903, %v928
      %v1004 = vmax.f32 %v904, %v929
      %v1005 = vmax.f32 %v905, %v930
      %v1006 = vmax.f32 %v906, %v931
      %v1007 = vmax.f32 %v907, %v932
      %v1008 = vmax.f32 %v908, %v933
      %v1009 = vmax.f32 %v909, %v934
      %v1010 = vmax.f32 %v910, %v935
      %v1011 = vmax.f32 %v911, %v936
      %v1012 = vmax.f32 %v912, %v937
      %v1013 = vmax.f32 %v913, %v938
      %v1014 = vmax.f32 %v914, %v939
      %v1015 = vmax.f32 %v915, %v940
      %v1016 = vmax.f32 %v916, %v941
      %v1017 = vmax.f32 %v917, %v942
      %v1018 = vmax.f32 %v918, %v943
      %v1019 = vmax.f32 %v919, %v944
      %v1020 = vmax.f32 %v920, %v945
      %v1021 = vmax.f32 %v921, %v946
      %v1022 = vmax.f32 %v922, %v947
      %v1023 = vmax.f32 %v948, %v973
      %v1024 = vmax.f32 %v949, %v974
      %v1025 = vmax.f32 %v950, %v975
      %v1026 = vmax.f32 %v951, %v976
      %v1027 = vmax.f32 %v952, %v977
      %v1028 = vmax.f32 %v953, %v978
      %v1029 = vmax.f32 %v954, %v979
      %v1030 = vmax.f32 %v955, %v980
      %v1031 = vmax.f32 %v956, %v981
      %v1032 = vmax.f32 %v957, %v982
      %v1033 = vmax.f32 %v958, %v983
      %v1034 = vmax.f32 %v959, %v984
      %v1035 = vmax.f32 %v960, %v985
      %v1036 = vmax.f32 %v961, %v986
      %v1037 = vmax.f32 %v962, %v987
      %v1038 = vmax.f32 %v963, %v988
      %v1039 = vmax.f32 %v964, %v989
      %v1040 = vmax.f32 %v965, %v990
      %v1041 = vmax.f32 %v966, %v991
      %v1042 = vmax.f32 %v967, %v992
      %v1043 = vmax.f32 %v968, %v993
      %v1044 = vmax.f32 %v969, %v994
      %v1045 = vmax.f32 %v970, %v995
      %v1046 = vmax.f32 %v971, %v996
      %v1047 = vmax.f32 %v972, %v997
      %v1048 = vmax.f32 %v998, %v1023
      %v1049 = vmax.f32 %v999, %v1024
      %v1050 = vmax.f32 %v1000, %v1025
      %v1051 = vmax.f32 %v1001, %v1026
      %v1052 = vmax.f32 %v1002, %v1027
      %v1053 = vmax.f32 %v1003, %v1028
      %v1054 = vmax.f32 %v1004, %v1029
      %v1055 = vmax.f32 %v1005, %v1030
      %v1056 = vmax.f32 %v1006, %v1031
      %v1057 = vmax.f32 %v1007, %v1032
      %v1058 = vmax.f32 %v1008, %v1033
      %v1059 = vmax.f32 %v1009, %v1034
      %v1060 = vmax.f32 %v1010, %v1035
      %v1061 = vmax.f32 %v1011, %v1036
      %v1062 = vmax.f32 %v1012, %v1037
      %v1063 = vmax.f32 %v1013, %v1038
      %v1064 = vmax.f32 %v1014, %v1039
      %v1065 = vmax.f32 %v1015, %v1040
      %v1066 = vmax.f32 %v1016, %v1041
      %v1067 = vmax.f32 %v1017, %v1042
      %v1068 = vmax.f32 %v1018, %v1043
      %v1069 = vmax.f32 %v1019, %v1044
      %v1070 = vmax.f32 %v1020, %v1045
      %v1071 = vmax.f32 %v1021, %v1046
      %v1072 = vmax.f32 %v1022, %v1047
      %vm1073 = vcmask 64512
      %1074 = vst.msk [vmem:[%s170] sm:$0xff] %vm1073, %v1048
      %1075 = vst.msk [vmem:[%s170 + $0x8] sm:$0xff] %vm1073, %v1049
      %1076 = vst.msk [vmem:[%s170 + $0x10] sm:$0xff] %vm1073, %v1050
      %1077 = vst.msk [vmem:[%s170 + $0x18] sm:$0xff] %vm1073, %v1051
      %1078 = vst.msk [vmem:[%s170 + $0x20] sm:$0xff] %vm1073, %v1052
      %1079 = vst.msk [vmem:[%s170 + $0x28] sm:$0xff] %vm1073, %v1053
      %1080 = vst.msk [vmem:[%s170 + $0x30] sm:$0xff] %vm1073, %v1054
      %1081 = vst.msk [vmem:[%s170 + $0x38] sm:$0xff] %vm1073, %v1055
      %1082 = vst.msk [vmem:[%s170 + $0x40] sm:$0xff] %vm1073, %v1056
      %1083 = vst.msk [vmem:[%s170 + $0x48] sm:$0xff] %vm1073, %v1057
      %1084 = vst.msk [vmem:[%s170 + $0x50] sm:$0xff] %vm1073, %v1058
      %1085 = vst.msk [vmem:[%s170 + $0x58] sm:$0xff] %vm1073, %v1059
      %1086 = vst.msk [vmem:[%s170 + $0x60] sm:$0xff] %vm1073, %v1060
      %1087 = vst.msk [vmem:[%s170 + $0x68] sm:$0xff] %vm1073, %v1061
      %1088 = vst.msk [vmem:[%s170 + $0x70] sm:$0xff] %vm1073, %v1062
      %1089 = vst.msk [vmem:[%s170 + $0x78] sm:$0xff] %vm1073, %v1063
      %1090 = vst.msk [vmem:[%s170 + $0x80] sm:$0xff] %vm1073, %v1064
      %1091 = vst.msk [vmem:[%s170 + $0x88] sm:$0xff] %vm1073, %v1065
      %1092 = vst.msk [vmem:[%s170 + $0x90] sm:$0xff] %vm1073, %v1066
      %1093 = vst.msk [vmem:[%s170 + $0x98] sm:$0xff] %vm1073, %v1067
      %1094 = vst.msk [vmem:[%s170 + $0xa0] sm:$0xff] %vm1073, %v1068
      %1095 = vst.msk [vmem:[%s170 + $0xa8] sm:$0xff] %vm1073, %v1069
      %1096 = vst.msk [vmem:[%s170 + $0xb0] sm:$0xff] %vm1073, %v1070
      %1097 = vst.msk [vmem:[%s170 + $0xb8] sm:$0xff] %vm1073, %v1071
      %1098 = vst.msk [vmem:[%s170 + $0xc0] sm:$0xff] %vm1073, %v1072
      %p1099 = scmp.lt.s32.totalorder %s14, 1
      %s1100 = scalar_select %p1099, %s14, 1
      %s1101 = smul.addr %s1100, 25
      %s1102 = smul.addr %s1101, 8
      %s1103 = scalar_lea.vmem %s3, %s1102
      // Predicated region
      $region33: #{net_forward.3} parent=31 // pred_check
        %p1104 = pneg %p100
      $region34: #{net_forward.3} parent=31 // pred_check_branch
        %1106 = sbr.rel (%p1104) target = $region36
      $region35: #{net_forward.3} parent=31 // pred_region
        _
      $region36: #{net_forward.3} parent=31 // pred_fallthru
        _
    $region32: #{net_forward.3} parent=5 // pred_fallthru
      _
    %p1107 = scmp.le.s32.totalorder 2, %s9
    // Predicated region
    $region37: #{net_forward.3} parent=5 // pred_check
      %p1108 = pneg %p1107
    $region38: #{net_forward.3} parent=5 // pred_check_branch
      %1110 = sbr.rel (%p1108) target = $region40
    $region39: #{net_forward.3} parent=5 // pred_region
      %s1111 = ssub.s32 %s9, 2
      // Predicated region
      $region41: #{net_forward.3} parent=39 // pred_check
        %p1112 = pneg %p106
      $region42: #{net_forward.3} parent=39 // pred_check_branch
        %1114 = sbr.rel (%p1112) target = $region44
      $region43: #{net_forward.3} parent=39 // pred_region
        %p1115 = scmp.lt.s32.totalorder %s15, 1
        %s1116 = scalar_select %p1115, %s15, 1
        %s1117 = smul.addr %s1116, 25
        %s1118 = smul.addr %s1117, 8
        %s1119 = scalar_lea.vmem %s3, %s1118
      $region44: #{net_forward.3} parent=39 // pred_fallthru
        _
    $region40: #{net_forward.3} parent=5 // pred_fallthru
      _
  $region6: #{net_forward.3} parent=0 // loop_footer
    %s13 = sadd.s32 1, %s9
  $region7: #{net_forward.3} parent=0 // loop_footer_branch
    %8 = sbr.rel target = $region3
  $region8: #{net_forward.3} parent=0 // loop_exit
    _

// kernel: net_forward.4
$region0: #{net_forward.4}
  #allocation0 [shape = 'u32[]', space=smem, size = 0x4, offset = 0x4, fixed_abs, tag = 'smem constant byte address 0x4 - core index']
  #allocation1 [shape = 'u32[72,128]{1,0:T(1,128)}', space=vmem, size = 0x9000, scoped, tag = 'internal scratch']
  %s0 = inlined_call_operand.vmem [shape: bf16[2,128,256], index: 0, kind: input, shape index: {}]
  %s1 = inlined_call_operand.vmem [shape: bf16[256,128], index: 1, kind: input, shape index: {}]
  %s2 = inlined_call_operand.vmem [shape: f32[1,128], index: 2, kind: input, shape index: {}]
  %s3 = inlined_call_operand.vmem [shape: f32[2,32,16], index: 3, kind: output, shape index: {}]
  %s4 = sld [smem:[#allocation0]]
  $region45: #{net_forward.4} parent=0
    _
  %s6 = ssub.s32 1, %s4
  %s7 = scalar_select 0, %s6, %s4
  loop: start=0, step=1, limit=4
  $region2: #{net_forward.4} parent=0 // loop_pre_header
    _
  $region3: #{net_forward.4} parent=0 // loop_header
    %s9 = sphi 0, %s13
    %p10 = scmp.ge.s32.totalorder %s9, 4
    %s19 = sphi 0, %s21
    %s22 = sphi 0, %s19
    %s23 = sphi 0, %s22
    %s39 = sphi 0, %s23
    %s43 = sphi 0, %s43
    %s45 = sphi 0, %s43
    %s46 = sphi 0, %s45
    %s60 = sphi 0, %s46
    %s64 = sphi 0, %s64
    %s66 = sphi 0, %s64
    %s67 = sphi 0, %s66
    %s81 = sphi 0, %s67
    %s87 = sphi 0, %s89
    %s90 = sphi 0, %s87
    %s91 = sphi 0, %s90
    %s107 = sphi 0, %s91
  $region4: #{net_forward.4} parent=0 // loop_header_branch
    %12 = sbr.rel (%p10) target = $region8
  $region5: #{net_forward.4} parent=0 // loop_body
    %s14 = ssub.s32 %s9, 1
    %s15 = ssub.s32 %s9, 2
    %s16 = sadd.s32 %s9, 1
    %s17 = ssub.s32 %s9, %s16
    %p18 = scmp.eq.s32.totalorder %s17, 0
    %s20 = sadd.s32 %s19, 1
    %s21 = scalar_select %p18, %s19, %s20
    %p24 = pneg %p18
    %p25 = scmp.eq.s32.totalorder %s9, 1
    %p26 = por %p24, %p25
    %p27 = scmp.ne.s32.totalorder %s19, %s22
    %p28 = scmp.eq.s32.totalorder %s9, 0
    %p29 = por %p27, %p28
    %p30 = scmp.ne.s32.totalorder %s19, %s22
    %p31 = scmp.eq.s32.totalorder %s14, 1
    %p32 = por %p30, %p31
    %p33 = scmp.ne.s32.totalorder %s22, %s23
    %p34 = scmp.eq.s32.totalorder %s14, 0
    %p35 = por %p33, %p34
    %p36 = scmp.ne.s32.totalorder %s22, %s23
    %p37 = scmp.eq.s32.totalorder %s15, 1
    %p38 = por %p36, %p37
    %p40 = scmp.ne.s32.totalorder %s23, %s39
    %p41 = scmp.eq.s32.totalorder %s15, 0
    %p42 = por %p40, %p41
    %s44 = sadd.s32 %s43, 1
    %p47 = scmp.eq.s32.totalorder %s9, 1
    %p48 = scmp.ne.s32.totalorder %s43, %s45
    %p49 = scmp.eq.s32.totalorder %s9, 0
    %p50 = por %p48, %p49
    %p51 = scmp.ne.s32.totalorder %s43, %s45
    %p52 = scmp.eq.s32.totalorder %s14, 1
    %p53 = por %p51, %p52
    %p54 = scmp.ne.s32.totalorder %s45, %s46
    %p55 = scmp.eq.s32.totalorder %s14, 0
    %p56 = por %p54, %p55
    %p57 = scmp.ne.s32.totalorder %s45, %s46
    %p58 = scmp.eq.s32.totalorder %s15, 1
    %p59 = por %p57, %p58
    %p61 = scmp.ne.s32.totalorder %s46, %s60
    %p62 = scmp.eq.s32.totalorder %s15, 0
    %p63 = por %p61, %p62
    %s65 = sadd.s32 %s64, 1
    %p68 = scmp.eq.s32.totalorder %s9, 1
    %p69 = scmp.ne.s32.totalorder %s64, %s66
    %p70 = scmp.eq.s32.totalorder %s9, 0
    %p71 = por %p69, %p70
    %p72 = scmp.ne.s32.totalorder %s64, %s66
    %p73 = scmp.eq.s32.totalorder %s14, 1
    %p74 = por %p72, %p73
    %p75 = scmp.ne.s32.totalorder %s66, %s67
    %p76 = scmp.eq.s32.totalorder %s14, 0
    %p77 = por %p75, %p76
    %p78 = scmp.ne.s32.totalorder %s66, %s67
    %p79 = scmp.eq.s32.totalorder %s15, 1
    %p80 = por %p78, %p79
    %p82 = scmp.ne.s32.totalorder %s67, %s81
    %p83 = scmp.eq.s32.totalorder %s15, 0
    %p84 = por %p82, %p83
    %s85 = ssub.s32 %s9, %s16
    %p86 = scmp.eq.s32.totalorder %s85, 0
    %s88 = sadd.s32 %s87, 1
    %s89 = scalar_select %p86, %s87, %s88
    %p92 = pneg %p86
    %p93 = scmp.eq.s32.totalorder %s9, 1
    %p94 = por %p92, %p93
    %p95 = scmp.ne.s32.totalorder %s87, %s90
    %p96 = scmp.eq.s32.totalorder %s9, 0
    %p97 = por %p95, %p96
    %p98 = scmp.ne.s32.totalorder %s87, %s90
    %p99 = scmp.eq.s32.totalorder %s14, 1
    %p100 = por %p98, %p99
    %p101 = scmp.ne.s32.totalorder %s90, %s91
    %p102 = scmp.eq.s32.totalorder %s14, 0
    %p103 = por %p101, %p102
    %p104 = scmp.ne.s32.totalorder %s90, %s91
    %p105 = scmp.eq.s32.totalorder %s15, 1
    %p106 = por %p104, %p105
    %p108 = scmp.ne.s32.totalorder %s91, %s107
    %p109 = scmp.eq.s32.totalorder %s15, 0
    %p110 = por %p108, %p109
    %p111 = scmp.le.s32.totalorder 1, %s9
    %p112 = scmp.lt.s32.totalorder %s9, 3
    %p113 = pnand %p111, %p112
    %p114 = pneg %p113
    // Predicated region
    $region9: #{net_forward.4} parent=5 // pred_check
      _
    $region10: #{net_forward.4} parent=5 // pred_check_branch
      %116 = sbr.rel (%p113) target = $region12
    $region11: #{net_forward.4} parent=5 // pred_region
      %s117 = ssub.s32 %s9, 1
      // Predicated region
      $region13: #{net_forward.4} parent=11 // pred_check
        %p118 = pneg %p56
      $region14: #{net_forward.4} parent=11 // pred_check_branch
        %120 = sbr.rel (%p118) target = $region16
      $region15: #{net_forward.4} parent=11 // pred_region
        _
      $region16: #{net_forward.4} parent=11 // pred_fallthru
        _
      // Predicated region
      $region17: #{net_forward.4} parent=11 // pred_check
        %p121 = pneg %p77
      $region18: #{net_forward.4} parent=11 // pred_check_branch
        %123 = sbr.rel (%p121) target = $region20
      $region19: #{net_forward.4} parent=11 // pred_region
        _
      $region20: #{net_forward.4} parent=11 // pred_fallthru
        _
    $region12: #{net_forward.4} parent=5 // pred_fallthru
      _
    %p124 = scmp.lt.s32.totalorder %s9, 2
    // Predicated region
    $region21: #{net_forward.4} parent=5 // pred_check
      %p125 = pneg %p124
    $region22: #{net_forward.4} parent=5 // pred_check_branch
      %127 = sbr.rel (%p125) target = $region24
    $region23: #{net_forward.4} parent=5 // pred_region
      // Predicated region
      $region25: #{net_forward.4} parent=23 // pred_check
        %p128 = pneg %p29
      $region26: #{net_forward.4} parent=23 // pred_check_branch
        %130 = sbr.rel (%p128) target = $region28
      $region27: #{net_forward.4} parent=23 // pred_region
        %p131 = scmp.lt.s32.totalorder %s9, 1
        %s132 = scalar_select %p131, %s9, 1
        %s133 = smul.addr %s132, 32
        %s134 = smul.addr %s133, 4
        %s135 = scalar_lea.vmem %s0, %s134
      $region28: #{net_forward.4} parent=23 // pred_fallthru
        _
    $region24: #{net_forward.4} parent=5 // pred_fallthru
      _
    %p136 = scmp.le.s32.totalorder 1, %s9
    %p137 = scmp.lt.s32.totalorder %s9, 3
    %p138 = pnand %p136, %p137
    %p139 = pneg %p138
    // Predicated region
    $region29: #{net_forward.4} parent=5 // pred_check
      _
    $region30: #{net_forward.4} parent=5 // pred_check_branch
      %141 = sbr.rel (%p138) target = $region32
    $region31: #{net_forward.4} parent=5 // pred_region
      %s142 = ssub.s32 %s9, 1
      %p143 = scmp.lt.s32.totalorder %s14, 1
      %s144 = scalar_select %p143, %s14, 1
      %s145 = smul.addr %s144, 32
      %s146 = smul.addr %s145, 4
      %s147 = scalar_lea.vmem %s0, %s146
      %p148 = pneg %p35
      %p149 = pneg %p32
      %p150 = pneg %p56
      %p151 = pneg %p53
      %p152 = pneg %p77
      %p153 = pneg %p74
      %p154 = pneg %p103
      %p155 = pneg %p100
      %p156 = scmp.lt.s32.totalorder %s14, 1
      %s157 = scalar_select %p156, %s14, 1
      %s158 = smul.addr %s157, 4
      %s159 = smul.addr %s158, 8
      %s160 = scalar_lea.vmem %s3, %s159
      %p161 = scmp.lt.s32.totalorder %s14, 1
      %s162 = scalar_select %p161, %s14, 1
      %s163 = smul.addr %s162, 32
      %s164 = smul.addr %s163, 4
      %s165 = scalar_lea.vmem %s0, %s164
      %p166 = scmp.lt.s32.totalorder %s14, 1
      %s167 = scalar_select %p166, %s14, 1
      %s168 = smul.addr %s167, 4
      %s169 = smul.addr %s168, 8
      %s170 = scalar_lea.vmem %s3, %s169
      %v171 = vld [vmem:[%s165] sm:$0xff]
      %v172 = vld [vmem:[%s165 + $0x8] sm:$0xff]
      %v173 = vld [vmem:[%s165 + $0x10] sm:$0xff]
      %v174 = vld [vmem:[%s165 + $0x18] sm:$0xff]
      %v175 = vld [vmem:[%s165 + $0x20] sm:$0xff]
      %v176 = vld [vmem:[%s165 + $0x28] sm:$0xff]
      %v177 = vld [vmem:[%s165 + $0x30] sm:$0xff]
      %v178 = vld [vmem:[%s165 + $0x38] sm:$0xff]
      %v179 = vld [vmem:[%s165 + $0x40] sm:$0xff]
      %v180 = vld [vmem:[%s165 + $0x48] sm:$0xff]
      %v181 = vld [vmem:[%s165 + $0x50] sm:$0xff]
      %v182 = vld [vmem:[%s165 + $0x58] sm:$0xff]
      %v183 = vld [vmem:[%s165 + $0x60] sm:$0xff]
      %v184 = vld [vmem:[%s165 + $0x68] sm:$0xff]
      %v185 = vld [vmem:[%s165 + $0x70] sm:$0xff]
      %v186 = vld [vmem:[%s165 + $0x78] sm:$0xff]
      %v187 = vld [vmem:[%s1] sm:$0xf]
      %v188 = vld [vmem:[%s1 + $0x4] sm:$0xf]
      %v189 = vld [vmem:[%s1 + $0x8] sm:$0xf]
      %v190 = vld [vmem:[%s1 + $0xc] sm:$0xf]
      %v191 = vld [vmem:[%s1 + $0x10] sm:$0xf]
      %v192 = vld [vmem:[%s1 + $0x14] sm:$0xf]
      %v193 = vld [vmem:[%s1 + $0x18] sm:$0xf]
      %v194 = vld [vmem:[%s1 + $0x1c] sm:$0xf]
      %v195 = vld [vmem:[%s1 + $0x20] sm:$0xf]
      %v196 = vld [vmem:[%s1 + $0x24] sm:$0xf]
      %v197 = vld [vmem:[%s1 + $0x28] sm:$0xf]
      %v198 = vld [vmem:[%s1 + $0x2c] sm:$0xf]
      %v199 = vld [vmem:[%s1 + $0x30] sm:$0xf]
      %v200 = vld [vmem:[%s1 + $0x34] sm:$0xf]
      %v201 = vld [vmem:[%s1 + $0x38] sm:$0xf]
      %v202 = vld [vmem:[%s1 + $0x3c] sm:$0xf]
      %v203 = vld [vmem:[%s1 + $0x40] sm:$0xf]
      %v204 = vld [vmem:[%s1 + $0x44] sm:$0xf]
      %v205 = vld [vmem:[%s1 + $0x48] sm:$0xf]
      %v206 = vld [vmem:[%s1 + $0x4c] sm:$0xf]
      %v207 = vld [vmem:[%s1 + $0x50] sm:$0xf]
      %v208 = vld [vmem:[%s1 + $0x54] sm:$0xf]
      %v209 = vld [vmem:[%s1 + $0x58] sm:$0xf]
      %v210 = vld [vmem:[%s1 + $0x5c] sm:$0xf]
      %v211 = vld [vmem:[%s1 + $0x60] sm:$0xf]
      %v212 = vld [vmem:[%s1 + $0x64] sm:$0xf]
      %v213 = vld [vmem:[%s1 + $0x68] sm:$0xf]
      %v214 = vld [vmem:[%s1 + $0x6c] sm:$0xf]
      %v215 = vld [vmem:[%s1 + $0x70] sm:$0xf]
      %v216 = vld [vmem:[%s1 + $0x74] sm:$0xf]
      %v217 = vld [vmem:[%s1 + $0x78] sm:$0xf]
      %v218 = vld [vmem:[%s1 + $0x7c] sm:$0xf]
      %v219 = vld [vmem:[%s2] sm:$0x1]
      %v221 = vperm.slane %v219, 0
      %v239 = vunpack.c.l.b16 %v171
      %v240 = vunpack.c.h.b16 %v171
      %v241 = vunpack.c.l.b16 %v172
      %v242 = vunpack.c.h.b16 %v172
      %v243 = vunpack.c.l.b16 %v173
      %v244 = vunpack.c.h.b16 %v173
      %v245 = vunpack.c.l.b16 %v174
      %v246 = vunpack.c.h.b16 %v174
      %v247 = vunpack.c.l.b16 %v175
      %v248 = vunpack.c.h.b16 %v175
      %v249 = vunpack.c.l.b16 %v176
      %v250 = vunpack.c.h.b16 %v176
      %v251 = vunpack.c.l.b16 %v177
      %v252 = vunpack.c.h.b16 %v177
      %v253 = vunpack.c.l.b16 %v178
      %v254 = vunpack.c.h.b16 %v178
      %v255 = vunpack.c.l.b16 %v179
      %v256 = vunpack.c.h.b16 %v179
      %v257 = vunpack.c.l.b16 %v180
      %v258 = vunpack.c.h.b16 %v180
      %v259 = vunpack.c.l.b16 %v181
      %v260 = vunpack.c.h.b16 %v181
      %v261 = vunpack.c.l.b16 %v182
      %v262 = vunpack.c.h.b16 %v182
      %v263 = vunpack.c.l.b16 %v183
      %v264 = vunpack.c.h.b16 %v183
      %v265 = vunpack.c.l.b16 %v184
      %v266 = vunpack.c.h.b16 %v184
      %v267 = vunpack.c.l.b16 %v185
      %v268 = vunpack.c.h.b16 %v185
      %v269 = vunpack.c.l.b16 %v186
      %v270 = vunpack.c.h.b16 %v186
      %v271 = vpack.c.b16 %v241, %v239
      %v272 = vpack.c.b16 %v242, %v240
      %v273 = vpack.c.b16 %v245, %v243
      %v274 = vpack.c.b16 %v246, %v244
      %v275 = vpack.c.b16 %v249, %v247
      %v276 = vpack.c.b16 %v250, %v248
      %v277 = vpack.c.b16 %v253, %v251
      %v278 = vpack.c.b16 %v254, %v252
      %v279 = vpack.c.b16 %v257, %v255
      %v280 = vpack.c.b16 %v258, %v256
      %v281 = vpack.c.b16 %v261, %v259
      %v282 = vpack.c.b16 %v262, %v260
      %v283 = vpack.c.b16 %v265, %v263
      %v284 = vpack.c.b16 %v266, %v264
      %v285 = vpack.c.b16 %v269, %v267
      %v286 = vpack.c.b16 %v270, %v268
      %v335 = vunpack.c.l.b16 %v187
      %v336 = vunpack.c.l.b16 %v188
      %v337 = vunpack.c.l.b16 %v189
      %v338 = vunpack.c.l.b16 %v190
      %v339 = vunpack.c.l.b16 %v191
      %v340 = vunpack.c.l.b16 %v192
      %v341 = vunpack.c.l.b16 %v193
      %v342 = vunpack.c.l.b16 %v194
      %v343 = vunpack.c.l.b16 %v195
      %v344 = vunpack.c.l.b16 %v196
      %v345 = vunpack.c.l.b16 %v197
      %v346 = vunpack.c.l.b16 %v198
      %v347 = vunpack.c.l.b16 %v199
      %v348 = vunpack.c.l.b16 %v200
      %v349 = vunpack.c.l.b16 %v201
      %v350 = vunpack.c.l.b16 %v202
      %v351 = vunpack.c.l.b16 %v203
      %v352 = vunpack.c.l.b16 %v204
      %v353 = vunpack.c.l.b16 %v205
      %v354 = vunpack.c.l.b16 %v206
      %v355 = vunpack.c.l.b16 %v207
      %v356 = vunpack.c.l.b16 %v208
      %v357 = vunpack.c.l.b16 %v209
      %v358 = vunpack.c.l.b16 %v210
      %v359 = vunpack.c.l.b16 %v211
      %v360 = vunpack.c.l.b16 %v212
      %v361 = vunpack.c.l.b16 %v213
      %v362 = vunpack.c.l.b16 %v214
      %v363 = vunpack.c.l.b16 %v215
      %v364 = vunpack.c.l.b16 %v216
      %v365 = vunpack.c.l.b16 %v217
      %v366 = vunpack.c.l.b16 %v218
      %v367 = vpack.c.b16 %v336, %v335
      %v368 = vpack.c.b16 %v338, %v337
      %v369 = vpack.c.b16 %v340, %v339
      %v370 = vpack.c.b16 %v342, %v341
      %v371 = vpack.c.b16 %v344, %v343
      %v372 = vpack.c.b16 %v346, %v345
      %v373 = vpack.c.b16 %v348, %v347
      %v374 = vpack.c.b16 %v350, %v349
      %v375 = vpack.c.b16 %v352, %v351
      %v376 = vpack.c.b16 %v354, %v353
      %v377 = vpack.c.b16 %v356, %v355
      %v378 = vpack.c.b16 %v358, %v357
      %v379 = vpack.c.b16 %v360, %v359
      %v380 = vpack.c.b16 %v362, %v361
      %v381 = vpack.c.b16 %v364, %v363
      %v382 = vpack.c.b16 %v366, %v365
      %399 = vmatpush.bf16.msra.mxu0 %v374
      %400 = vmatpush.bf16.msra.mxu0 %v373
      %401 = vmatpush.bf16.msra.mxu0 %v372
      %402 = vmatpush.bf16.msra.mxu0 %v371
      %403 = vmatpush.bf16.msra.mxu0 %v370
      %404 = vmatpush.bf16.msra.mxu0 %v369
      %405 = vmatpush.bf16.msra.mxu0 %v368
      %406 = vmatpush.bf16.msra.mxu0 %v367
      %407 = vmatmul.bf16.gmra.mxu0 %v271
      %v408 = vpop.f32.mrf.mxu0
      %v409 = vadd.f32 %v221, %v408
      %v410 = vpop.f32.mrf.mxu0
      %v411 = vadd.f32 %v221, %v410
      %412 = vmatmul.bf16.gmra.mxu0 %v273
      %v413 = vpop.f32.mrf.mxu0
      %v414 = vadd.f32 %v221, %v413
      %v415 = vpop.f32.mrf.mxu0
      %v416 = vadd.f32 %v221, %v415
      %417 = vmatmul.bf16.gmra.mxu0 %v275
      %v418 = vpop.f32.mrf.mxu0
      %v419 = vadd.f32 %v221, %v418
      %v420 = vpop.f32.mrf.mxu0
      %v421 = vadd.f32 %v221, %v420
      %422 = vmatmul.bf16.gmra.mxu0 %v277
      %v423 = vpop.f32.mrf.mxu0
      %v424 = vadd.f32 %v221, %v423
      %v425 = vpop.f32.mrf.mxu0
      %v426 = vadd.f32 %v221, %v425
      %427 = vmatmul.bf16.gmra.mxu0 %v279
      %v428 = vpop.f32.mrf.mxu0
      %v429 = vadd.f32 %v221, %v428
      %v430 = vpop.f32.mrf.mxu0
      %v431 = vadd.f32 %v221, %v430
      %432 = vmatmul.bf16.gmra.mxu0 %v281
      %v433 = vpop.f32.mrf.mxu0
      %v434 = vadd.f32 %v221, %v433
      %v435 = vpop.f32.mrf.mxu0
      %v436 = vadd.f32 %v221, %v435
      %437 = vmatmul.bf16.gmra.mxu0 %v283
      %v438 = vpop.f32.mrf.mxu0
      %v439 = vadd.f32 %v221, %v438
      %v440 = vpop.f32.mrf.mxu0
      %v441 = vadd.f32 %v221, %v440
      %442 = vmatmul.bf16.gmra.mxu0 %v285
      %v443 = vpop.f32.mrf.mxu0
      %v444 = vadd.f32 %v221, %v443
      %v445 = vpop.f32.mrf.mxu0
      %v446 = vadd.f32 %v221, %v445
      %447 = vdwg.mxu0
      %448 = vmatpush.bf16.msra.mxu0 %v382
      %449 = vmatpush.bf16.msra.mxu0 %v381
      %450 = vmatpush.bf16.msra.mxu0 %v380
      %451 = vmatpush.bf16.msra.mxu0 %v379
      %452 = vmatpush.bf16.msra.mxu0 %v378
      %453 = vmatpush.bf16.msra.mxu0 %v377
      %454 = vmatpush.bf16.msra.mxu0 %v376
      %455 = vmatpush.bf16.msra.mxu0 %v375
      %456 = vmatmul.bf16.gmra.mxu0 %v272
      %v457 = vpop.f32.mrf.mxu0
      %v458 = vadd.f32 %v409, %v457
      %v459 = vpop.f32.mrf.mxu0
      %v460 = vadd.f32 %v411, %v459
      %461 = vmatmul.bf16.gmra.mxu0 %v274
      %v462 = vpop.f32.mrf.mxu0
      %v463 = vadd.f32 %v414, %v462
      %v464 = vpop.f32.mrf.mxu0
      %v465 = vadd.f32 %v416, %v464
      %466 = vmatmul.bf16.gmra.mxu0 %v276
      %v467 = vpop.f32.mrf.mxu0
      %v468 = vadd.f32 %v419, %v467
      %v469 = vpop.f32.mrf.mxu0
      %v470 = vadd.f32 %v421, %v469
      %471 = vmatmul.bf16.gmra.mxu0 %v278
      %v472 = vpop.f32.mrf.mxu0
      %v473 = vadd.f32 %v424, %v472
      %v474 = vpop.f32.mrf.mxu0
      %v475 = vadd.f32 %v426, %v474
      %476 = vmatmul.bf16.gmra.mxu0 %v280
      %v477 = vpop.f32.mrf.mxu0
      %v478 = vadd.f32 %v429, %v477
      %v479 = vpop.f32.mrf.mxu0
      %v480 = vadd.f32 %v431, %v479
      %481 = vmatmul.bf16.gmra.mxu0 %v282
      %v482 = vpop.f32.mrf.mxu0
      %v483 = vadd.f32 %v434, %v482
      %v484 = vpop.f32.mrf.mxu0
      %v485 = vadd.f32 %v436, %v484
      %486 = vmatmul.bf16.gmra.mxu0 %v284
      %v487 = vpop.f32.mrf.mxu0
      %v488 = vadd.f32 %v439, %v487
      %v489 = vpop.f32.mrf.mxu0
      %v490 = vadd.f32 %v441, %v489
      %491 = vmatmul.bf16.gmra.mxu0 %v286
      %v492 = vpop.f32.mrf.mxu0
      %v493 = vadd.f32 %v444, %v492
      %v494 = vpop.f32.mrf.mxu0
      %v495 = vadd.f32 %v446, %v494
      %496 = vdwg.mxu0
      %v497 = vmax.f32 %v458, 0.0
      %v498 = vmax.f32 %v460, 0.0
      %v499 = vmax.f32 %v463, 0.0
      %v500 = vmax.f32 %v465, 0.0
      %v501 = vmax.f32 %v468, 0.0
      %v502 = vmax.f32 %v470, 0.0
      %v503 = vmax.f32 %v473, 0.0
      %v504 = vmax.f32 %v475, 0.0
      %v505 = vmax.f32 %v478, 0.0
      %v506 = vmax.f32 %v480, 0.0
      %v507 = vmax.f32 %v483, 0.0
      %v508 = vmax.f32 %v485, 0.0
      %v509 = vmax.f32 %v488, 0.0
      %v510 = vmax.f32 %v490, 0.0
      %v511 = vmax.f32 %v493, 0.0
      %v512 = vmax.f32 %v495, 0.0
      %v513 = vmax.f32 %v497, %v501
      %v514 = vmax.f32 %v498, %v502
      %v515 = vmax.f32 %v499, %v503
      %v516 = vmax.f32 %v500, %v504
      %v517 = vmax.f32 %v505, %v509
      %v518 = vmax.f32 %v506, %v510
      %v519 = vmax.f32 %v507, %v511
      %v520 = vmax.f32 %v508, %v512
      %v521 = vmax.f32 %v513, %v517
      %v522 = vmax.f32 %v514, %v518
      %v523 = vmax.f32 %v515, %v519
      %v524 = vmax.f32 %v516, %v520
      %vm525 = vcmask 130048
      %526 = vst.msk [vmem:[%s170] sm:$0xff] %vm525, %v521
      %527 = vst.msk [vmem:[%s170 + $0x8] sm:$0xff] %vm525, %v522
      %528 = vst.msk [vmem:[%s170 + $0x10] sm:$0xff] %vm525, %v523
      %529 = vst.msk [vmem:[%s170 + $0x18] sm:$0xff] %vm525, %v524
      %p530 = scmp.lt.s32.totalorder %s14, 1
      %s531 = scalar_select %p530, %s14, 1
      %s532 = smul.addr %s531, 4
      %s533 = smul.addr %s532, 8
      %s534 = scalar_lea.vmem %s3, %s533
      // Predicated region
      $region33: #{net_forward.4} parent=31 // pred_check
        %p535 = pneg %p100
      $region34: #{net_forward.4} parent=31 // pred_check_branch
        %537 = sbr.rel (%p535) target = $region36
      $region35: #{net_forward.4} parent=31 // pred_region
        _
      $region36: #{net_forward.4} parent=31 // pred_fallthru
        _
    $region32: #{net_forward.4} parent=5 // pred_fallthru
      _
    %p538 = scmp.le.s32.totalorder 2, %s9
    // Predicated region
    $region37: #{net_forward.4} parent=5 // pred_check
      %p539 = pneg %p538
    $region38: #{net_forward.4} parent=5 // pred_check_branch
      %541 = sbr.rel (%p539) target = $region40
    $region39: #{net_forward.4} parent=5 // pred_region
      %s542 = ssub.s32 %s9, 2
      // Predicated region
      $region41: #{net_forward.4} parent=39 // pred_check
        %p543 = pneg %p106
      $region42: #{net_forward.4} parent=39 // pred_check_branch
        %545 = sbr.rel (%p543) target = $region44
      $region43: #{net_forward.4} parent=39 // pred_region
        %p546 = scmp.lt.s32.totalorder %s15, 1
        %s547 = scalar_select %p546, %s15, 1
        %s548 = smul.addr %s547, 4
        %s549 = smul.addr %s548, 8
        %s550 = scalar_lea.vmem %s3, %s549
      $region44: #{net_forward.4} parent=39 // pred_fallthru
        _
    $region40: #{net_forward.4} parent=5 // pred_fallthru
      _
  $region6: #{net_forward.4} parent=0 // loop_footer
    %s13 = sadd.s32 1, %s9
  $region7: #{net_forward.4} parent=0 // loop_footer_branch
    %8 = sbr.rel target = $region3
  $region8: #{net_forward.4} parent=0 // loop_exit
    _

// kernel: net_forward.5
$region0: #{net_forward.5}
  #allocation0 [shape = 'u32[]', space=smem, size = 0x4, offset = 0x4, fixed_abs, tag = 'smem constant byte address 0x4 - core index']
  #allocation1 [shape = 'u32[72,128]{1,0:T(1,128)}', space=vmem, size = 0x9000, scoped, tag = 'internal scratch']
  %s0 = inlined_call_operand.vmem [shape: bf16[8,512], index: 0, kind: input, shape index: {}]
  %s1 = inlined_call_operand.vmem [shape: bf16[512,128], index: 1, kind: input, shape index: {}]
  %s2 = inlined_call_operand.vmem [shape: bf16[128,128], index: 2, kind: input, shape index: {}]
  %s3 = inlined_call_operand.vmem [shape: bf16[128,128], index: 3, kind: input, shape index: {}]
  %s4 = inlined_call_operand.vmem [shape: bf16[128,128], index: 4, kind: input, shape index: {}]
  %s5 = inlined_call_operand.vmem [shape: bf16[128,128], index: 5, kind: input, shape index: {}]
  %s6 = inlined_call_operand.vmem [shape: f32[1,128], index: 6, kind: input, shape index: {}]
  %s7 = inlined_call_operand.vmem [shape: f32[1,128], index: 7, kind: input, shape index: {}]
  %s8 = inlined_call_operand.vmem [shape: f32[1,128], index: 8, kind: input, shape index: {}]
  %s9 = inlined_call_operand.vmem [shape: f32[1,128], index: 9, kind: input, shape index: {}]
  %s10 = inlined_call_operand.vmem [shape: f32[1,128], index: 10, kind: input, shape index: {}]
  %s11 = inlined_call_operand.vmem [shape: f32[8,128], index: 11, kind: output, shape index: {}]
  %s12 = sld [smem:[#allocation0]]
  $region54: #{net_forward.5} parent=0
    _
  %s14 = ssub.s32 1, %s12
  %s15 = scalar_select 0, %s14, %s12
  // Predicated region
  $region2: #{net_forward.5} parent=0 // pred_check
    _
  $region3: #{net_forward.5} parent=0 // pred_check_branch
    %17 = sbr.rel (0) target = $region5
  $region4: #{net_forward.5} parent=0 // pred_region
    _
  $region5: #{net_forward.5} parent=0 // pred_fallthru
    _
  // Predicated region
  $region6: #{net_forward.5} parent=0 // pred_check
    _
  $region7: #{net_forward.5} parent=0 // pred_check_branch
    %19 = sbr.rel (0) target = $region9
  $region8: #{net_forward.5} parent=0 // pred_region
    _
  $region9: #{net_forward.5} parent=0 // pred_fallthru
    _
  // Predicated region
  $region10: #{net_forward.5} parent=0 // pred_check
    _
  $region11: #{net_forward.5} parent=0 // pred_check_branch
    %21 = sbr.rel (0) target = $region13
  $region12: #{net_forward.5} parent=0 // pred_region
    _
  $region13: #{net_forward.5} parent=0 // pred_fallthru
    _
  // Predicated region
  $region14: #{net_forward.5} parent=0 // pred_check
    _
  $region15: #{net_forward.5} parent=0 // pred_check_branch
    %23 = sbr.rel (0) target = $region17
  $region16: #{net_forward.5} parent=0 // pred_region
    _
  $region17: #{net_forward.5} parent=0 // pred_fallthru
    _
  // Predicated region
  $region18: #{net_forward.5} parent=0 // pred_check
    _
  $region19: #{net_forward.5} parent=0 // pred_check_branch
    %25 = sbr.rel (0) target = $region21
  $region20: #{net_forward.5} parent=0 // pred_region
    _
  $region21: #{net_forward.5} parent=0 // pred_fallthru
    _
  // Predicated region
  $region22: #{net_forward.5} parent=0 // pred_check
    _
  $region23: #{net_forward.5} parent=0 // pred_check_branch
    %27 = sbr.rel (0) target = $region25
  $region24: #{net_forward.5} parent=0 // pred_region
    _
  $region25: #{net_forward.5} parent=0 // pred_fallthru
    _
  // Predicated region
  $region26: #{net_forward.5} parent=0 // pred_check
    _
  $region27: #{net_forward.5} parent=0 // pred_check_branch
    %29 = sbr.rel (0) target = $region29
  $region28: #{net_forward.5} parent=0 // pred_region
    _
  $region29: #{net_forward.5} parent=0 // pred_fallthru
    _
  // Predicated region
  $region30: #{net_forward.5} parent=0 // pred_check
    _
  $region31: #{net_forward.5} parent=0 // pred_check_branch
    %31 = sbr.rel (0) target = $region33
  $region32: #{net_forward.5} parent=0 // pred_region
    _
  $region33: #{net_forward.5} parent=0 // pred_fallthru
    _
  // Predicated region
  $region34: #{net_forward.5} parent=0 // pred_check
    _
  $region35: #{net_forward.5} parent=0 // pred_check_branch
    %33 = sbr.rel (0) target = $region37
  $region36: #{net_forward.5} parent=0 // pred_region
    _
  $region37: #{net_forward.5} parent=0 // pred_fallthru
    _
  // Predicated region
  $region38: #{net_forward.5} parent=0 // pred_check
    _
  $region39: #{net_forward.5} parent=0 // pred_check_branch
    %35 = sbr.rel (0) target = $region41
  $region40: #{net_forward.5} parent=0 // pred_region
    _
  $region41: #{net_forward.5} parent=0 // pred_fallthru
    _
  // Predicated region
  $region42: #{net_forward.5} parent=0 // pred_check
    _
  $region43: #{net_forward.5} parent=0 // pred_check_branch
    %37 = sbr.rel (0) target = $region45
  $region44: #{net_forward.5} parent=0 // pred_region
    _
  $region45: #{net_forward.5} parent=0 // pred_fallthru
    _
  %v38 = vld [vmem:[%s0] sm:$0xff]
  %v39 = vld [vmem:[%s0 + $0x8] sm:$0xff]
  %v40 = vld [vmem:[%s1] sm:$0xf]
  %v41 = vld [vmem:[%s1 + $0x4] sm:$0xf]
  %v42 = vld [vmem:[%s1 + $0x8] sm:$0xf]
  %v43 = vld [vmem:[%s1 + $0xc] sm:$0xf]
  %v44 = vld [vmem:[%s1 + $0x10] sm:$0xf]
  %v45 = vld [vmem:[%s1 + $0x14] sm:$0xf]
  %v46 = vld [vmem:[%s1 + $0x18] sm:$0xf]
  %v47 = vld [vmem:[%s1 + $0x1c] sm:$0xf]
  %v48 = vld [vmem:[%s1 + $0x20] sm:$0xf]
  %v49 = vld [vmem:[%s1 + $0x24] sm:$0xf]
  %v50 = vld [vmem:[%s1 + $0x28] sm:$0xf]
  %v51 = vld [vmem:[%s1 + $0x2c] sm:$0xf]
  %v52 = vld [vmem:[%s1 + $0x30] sm:$0xf]
  %v53 = vld [vmem:[%s1 + $0x34] sm:$0xf]
  %v54 = vld [vmem:[%s1 + $0x38] sm:$0xf]
  %v55 = vld [vmem:[%s1 + $0x3c] sm:$0xf]
  %v56 = vld [vmem:[%s1 + $0x40] sm:$0xf]
  %v57 = vld [vmem:[%s1 + $0x44] sm:$0xf]
  %v58 = vld [vmem:[%s1 + $0x48] sm:$0xf]
  %v59 = vld [vmem:[%s1 + $0x4c] sm:$0xf]
  %v60 = vld [vmem:[%s1 + $0x50] sm:$0xf]
  %v61 = vld [vmem:[%s1 + $0x54] sm:$0xf]
  %v62 = vld [vmem:[%s1 + $0x58] sm:$0xf]
  %v63 = vld [vmem:[%s1 + $0x5c] sm:$0xf]
  %v64 = vld [vmem:[%s1 + $0x60] sm:$0xf]
  %v65 = vld [vmem:[%s1 + $0x64] sm:$0xf]
  %v66 = vld [vmem:[%s1 + $0x68] sm:$0xf]
  %v67 = vld [vmem:[%s1 + $0x6c] sm:$0xf]
  %v68 = vld [vmem:[%s1 + $0x70] sm:$0xf]
  %v69 = vld [vmem:[%s1 + $0x74] sm:$0xf]
  %v70 = vld [vmem:[%s1 + $0x78] sm:$0xf]
  %v71 = vld [vmem:[%s1 + $0x7c] sm:$0xf]
  %v72 = vld [vmem:[%s1 + $0x80] sm:$0xf]
  %v73 = vld [vmem:[%s1 + $0x84] sm:$0xf]
  %v74 = vld [vmem:[%s1 + $0x88] sm:$0xf]
  %v75 = vld [vmem:[%s1 + $0x8c] sm:$0xf]
  %v76 = vld [vmem:[%s1 + $0x90] sm:$0xf]
  %v77 = vld [vmem:[%s1 + $0x94] sm:$0xf]
  %v78 = vld [vmem:[%s1 + $0x98] sm:$0xf]
  %v79 = vld [vmem:[%s1 + $0x9c] sm:$0xf]
  %v80 = vld [vmem:[%s1 + $0xa0] sm:$0xf]
  %v81 = vld [vmem:[%s1 + $0xa4] sm:$0xf]
  %v82 = vld [vmem:[%s1 + $0xa8] sm:$0xf]
  %v83 = vld [vmem:[%s1 + $0xac] sm:$0xf]
  %v84 = vld [vmem:[%s1 + $0xb0] sm:$0xf]
  %v85 = vld [vmem:[%s1 + $0xb4] sm:$0xf]
  %v86 = vld [vmem:[%s1 + $0xb8] sm:$0xf]
  %v87 = vld [vmem:[%s1 + $0xbc] sm:$0xf]
  %v88 = vld [vmem:[%s1 + $0xc0] sm:$0xf]
  %v89 = vld [vmem:[%s1 + $0xc4] sm:$0xf]
  %v90 = vld [vmem:[%s1 + $0xc8] sm:$0xf]
  %v91 = vld [vmem:[%s1 + $0xcc] sm:$0xf]
  %v92 = vld [vmem:[%s1 + $0xd0] sm:$0xf]
  %v93 = vld [vmem:[%s1 + $0xd4] sm:$0xf]
  %v94 = vld [vmem:[%s1 + $0xd8] sm:$0xf]
  %v95 = vld [vmem:[%s1 + $0xdc] sm:$0xf]
  %v96 = vld [vmem:[%s1 + $0xe0] sm:$0xf]
  %v97 = vld [vmem:[%s1 + $0xe4] sm:$0xf]
  %v98 = vld [vmem:[%s1 + $0xe8] sm:$0xf]
  %v99 = vld [vmem:[%s1 + $0xec] sm:$0xf]
  %v100 = vld [vmem:[%s1 + $0xf0] sm:$0xf]
  %v101 = vld [vmem:[%s1 + $0xf4] sm:$0xf]
  %v102 = vld [vmem:[%s1 + $0xf8] sm:$0xf]
  %v103 = vld [vmem:[%s1 + $0xfc] sm:$0xf]
  %v104 = vld [vmem:[%s6] sm:$0x1]
  %v106 = vperm.slane %v104, 0
  %v110 = vunpack.c.l.b16 %v38
  %v111 = vunpack.c.h.b16 %v38
  %v112 = vunpack.c.l.b16 %v39
  %v113 = vunpack.c.h.b16 %v39
  %v114 = vpack.c.b16 %v110, %v110
  %v115 = vpack.c.b16 %v111, %v111
  %v116 = vpack.c.b16 %v112, %v112
  %v117 = vpack.c.b16 %v113, %v113
  %v186 = vunpack.c.l.b16 %v40
  %v187 = vunpack.c.l.b16 %v41
  %v188 = vunpack.c.l.b16 %v42
  %v189 = vunpack.c.l.b16 %v43
  %v190 = vunpack.c.l.b16 %v44
  %v191 = vunpack.c.l.b16 %v45
  %v192 = vunpack.c.l.b16 %v46
  %v193 = vunpack.c.l.b16 %v47
  %v194 = vunpack.c.l.b16 %v48
  %v195 = vunpack.c.l.b16 %v49
  %v196 = vunpack.c.l.b16 %v50
  %v197 = vunpack.c.l.b16 %v51
  %v198 = vunpack.c.l.b16 %v52
  %v199 = vunpack.c.l.b16 %v53
  %v200 = vunpack.c.l.b16 %v54
  %v201 = vunpack.c.l.b16 %v55
  %v202 = vunpack.c.l.b16 %v56
  %v203 = vunpack.c.l.b16 %v57
  %v204 = vunpack.c.l.b16 %v58
  %v205 = vunpack.c.l.b16 %v59
  %v206 = vunpack.c.l.b16 %v60
  %v207 = vunpack.c.l.b16 %v61
  %v208 = vunpack.c.l.b16 %v62
  %v209 = vunpack.c.l.b16 %v63
  %v210 = vunpack.c.l.b16 %v64
  %v211 = vunpack.c.l.b16 %v65
  %v212 = vunpack.c.l.b16 %v66
  %v213 = vunpack.c.l.b16 %v67
  %v214 = vunpack.c.l.b16 %v68
  %v215 = vunpack.c.l.b16 %v69
  %v216 = vunpack.c.l.b16 %v70
  %v217 = vunpack.c.l.b16 %v71
  %v218 = vunpack.c.l.b16 %v72
  %v219 = vunpack.c.l.b16 %v73
  %v220 = vunpack.c.l.b16 %v74
  %v221 = vunpack.c.l.b16 %v75
  %v222 = vunpack.c.l.b16 %v76
  %v223 = vunpack.c.l.b16 %v77
  %v224 = vunpack.c.l.b16 %v78
  %v225 = vunpack.c.l.b16 %v79
  %v226 = vunpack.c.l.b16 %v80
  %v227 = vunpack.c.l.b16 %v81
  %v228 = vunpack.c.l.b16 %v82
  %v229 = vunpack.c.l.b16 %v83
  %v230 = vunpack.c.l.b16 %v84
  %v231 = vunpack.c.l.b16 %v85
  %v232 = vunpack.c.l.b16 %v86
  %v233 = vunpack.c.l.b16 %v87
  %v234 = vunpack.c.l.b16 %v88
  %v235 = vunpack.c.l.b16 %v89
  %v236 = vunpack.c.l.b16 %v90
  %v237 = vunpack.c.l.b16 %v91
  %v238 = vunpack.c.l.b16 %v92
  %v239 = vunpack.c.l.b16 %v93
  %v240 = vunpack.c.l.b16 %v94
  %v241 = vunpack.c.l.b16 %v95
  %v242 = vunpack.c.l.b16 %v96
  %v243 = vunpack.c.l.b16 %v97
  %v244 = vunpack.c.l.b16 %v98
  %v245 = vunpack.c.l.b16 %v99
  %v246 = vunpack.c.l.b16 %v100
  %v247 = vunpack.c.l.b16 %v101
  %v248 = vunpack.c.l.b16 %v102
  %v249 = vunpack.c.l.b16 %v103
  %v250 = vpack.c.b16 %v187, %v186
  %v251 = vpack.c.b16 %v189, %v188
  %v252 = vpack.c.b16 %v191, %v190
  %v253 = vpack.c.b16 %v193, %v192
  %v254 = vpack.c.b16 %v195, %v194
  %v255 = vpack.c.b16 %v197, %v196
  %v256 = vpack.c.b16 %v199, %v198
  %v257 = vpack.c.b16 %v201, %v200
  %v258 = vpack.c.b16 %v203, %v202
  %v259 = vpack.c.b16 %v205, %v204
  %v260 = vpack.c.b16 %v207, %v206
  %v261 = vpack.c.b16 %v209, %v208
  %v262 = vpack.c.b16 %v211, %v210
  %v263 = vpack.c.b16 %v213, %v212
  %v264 = vpack.c.b16 %v215, %v214
  %v265 = vpack.c.b16 %v217, %v216
  %v266 = vpack.c.b16 %v219, %v218
  %v267 = vpack.c.b16 %v221, %v220
  %v268 = vpack.c.b16 %v223, %v222
  %v269 = vpack.c.b16 %v225, %v224
  %v270 = vpack.c.b16 %v227, %v226
  %v271 = vpack.c.b16 %v229, %v228
  %v272 = vpack.c.b16 %v231, %v230
  %v273 = vpack.c.b16 %v233, %v232
  %v274 = vpack.c.b16 %v235, %v234
  %v275 = vpack.c.b16 %v237, %v236
  %v276 = vpack.c.b16 %v239, %v238
  %v277 = vpack.c.b16 %v241, %v240
  %v278 = vpack.c.b16 %v243, %v242
  %v279 = vpack.c.b16 %v245, %v244
  %v280 = vpack.c.b16 %v247, %v246
  %v281 = vpack.c.b16 %v249, %v248
  %314 = vmatpush.bf16.msra.mxu0 %v257
  %315 = vmatpush.bf16.msra.mxu0 %v256
  %316 = vmatpush.bf16.msra.mxu0 %v255
  %317 = vmatpush.bf16.msra.mxu0 %v254
  %318 = vmatpush.bf16.msra.mxu0 %v253
  %319 = vmatpush.bf16.msra.mxu0 %v252
  %320 = vmatpush.bf16.msra.mxu0 %v251
  %321 = vmatpush.bf16.msra.mxu0 %v250
  %322 = vmatmul.bf16.gmra.mxu0 %v114
  %v323 = vpop.f32.mrf.mxu0
  %v324 = vadd.f32 %v106, %v323
  %v325 = vpop.f32.mrf.mxu0
  %326 = vdwg.mxu0
  %327 = vmatpush.bf16.msra.mxu0 %v265
  %328 = vmatpush.bf16.msra.mxu0 %v264
  %329 = vmatpush.bf16.msra.mxu0 %v263
  %330 = vmatpush.bf16.msra.mxu0 %v262
  %331 = vmatpush.bf16.msra.mxu0 %v261
  %332 = vmatpush.bf16.msra.mxu0 %v260
  %333 = vmatpush.bf16.msra.mxu0 %v259
  %334 = vmatpush.bf16.msra.mxu0 %v258
  %335 = vmatmul.bf16.gmra.mxu0 %v115
  %v336 = vpop.f32.mrf.mxu0
  %v337 = vadd.f32 %v324, %v336
  %v338 = vpop.f32.mrf.mxu0
  %339 = vdwg.mxu0
  %340 = vmatpush.bf16.msra.mxu0 %v273
  %341 = vmatpush.bf16.msra.mxu0 %v272
  %342 = vmatpush.bf16.msra.mxu0 %v271
  %343 = vmatpush.bf16.msra.mxu0 %v270
  %344 = vmatpush.bf16.msra.mxu0 %v269
  %345 = vmatpush.bf16.msra.mxu0 %v268
  %346 = vmatpush.bf16.msra.mxu0 %v267
  %347 = vmatpush.bf16.msra.mxu0 %v266
  %348 = vmatmul.bf16.gmra.mxu0 %v116
  %v349 = vpop.f32.mrf.mxu0
  %v350 = vadd.f32 %v337, %v349
  %v351 = vpop.f32.mrf.mxu0
  %352 = vdwg.mxu0
  %353 = vmatpush.bf16.msra.mxu0 %v281
  %354 = vmatpush.bf16.msra.mxu0 %v280
  %355 = vmatpush.bf16.msra.mxu0 %v279
  %356 = vmatpush.bf16.msra.mxu0 %v278
  %357 = vmatpush.bf16.msra.mxu0 %v277
  %358 = vmatpush.bf16.msra.mxu0 %v276
  %359 = vmatpush.bf16.msra.mxu0 %v275
  %360 = vmatpush.bf16.msra.mxu0 %v274
  %361 = vmatmul.bf16.gmra.mxu0 %v117
  %v362 = vpop.f32.mrf.mxu0
  %v363 = vadd.f32 %v350, %v362
  %v364 = vpop.f32.mrf.mxu0
  %365 = vdwg.mxu0
  %v366 = vmax.f32 %v363, 0.0
  %v367 = vpack.c.bf16 %v366, %v366
  %v368 = vld [vmem:[%s2] sm:$0xf]
  %v369 = vld [vmem:[%s2 + $0x4] sm:$0xf]
  %v370 = vld [vmem:[%s2 + $0x8] sm:$0xf]
  %v371 = vld [vmem:[%s2 + $0xc] sm:$0xf]
  %v372 = vld [vmem:[%s2 + $0x10] sm:$0xf]
  %v373 = vld [vmem:[%s2 + $0x14] sm:$0xf]
  %v374 = vld [vmem:[%s2 + $0x18] sm:$0xf]
  %v375 = vld [vmem:[%s2 + $0x1c] sm:$0xf]
  %v376 = vld [vmem:[%s2 + $0x20] sm:$0xf]
  %v377 = vld [vmem:[%s2 + $0x24] sm:$0xf]
  %v378 = vld [vmem:[%s2 + $0x28] sm:$0xf]
  %v379 = vld [vmem:[%s2 + $0x2c] sm:$0xf]
  %v380 = vld [vmem:[%s2 + $0x30] sm:$0xf]
  %v381 = vld [vmem:[%s2 + $0x34] sm:$0xf]
  %v382 = vld [vmem:[%s2 + $0x38] sm:$0xf]
  %v383 = vld [vmem:[%s2 + $0x3c] sm:$0xf]
  %v384 = vld [vmem:[%s7] sm:$0x1]
  %v386 = vperm.slane %v384, 0
  %v404 = vunpack.c.l.b16 %v368
  %v405 = vunpack.c.l.b16 %v369
  %v406 = vunpack.c.l.b16 %v370
  %v407 = vunpack.c.l.b16 %v371
  %v408 = vunpack.c.l.b16 %v372
  %v409 = vunpack.c.l.b16 %v373
  %v410 = vunpack.c.l.b16 %v374
  %v411 = vunpack.c.l.b16 %v375
  %v412 = vunpack.c.l.b16 %v376
  %v413 = vunpack.c.l.b16 %v377
  %v414 = vunpack.c.l.b16 %v378
  %v415 = vunpack.c.l.b16 %v379
  %v416 = vunpack.c.l.b16 %v380
  %v417 = vunpack.c.l.b16 %v381
  %v418 = vunpack.c.l.b16 %v382
  %v419 = vunpack.c.l.b16 %v383
  %v420 = vpack.c.b16 %v405, %v404
  %v421 = vpack.c.b16 %v407, %v406
  %v422 = vpack.c.b16 %v409, %v408
  %v423 = vpack.c.b16 %v411, %v410
  %v424 = vpack.c.b16 %v413, %v412
  %v425 = vpack.c.b16 %v415, %v414
  %v426 = vpack.c.b16 %v417, %v416
  %v427 = vpack.c.b16 %v419, %v418
  %436 = vmatpush.bf16.msra.mxu0 %v427
  %437 = vmatpush.bf16.msra.mxu0 %v426
  %438 = vmatpush.bf16.msra.mxu0 %v425
  %439 = vmatpush.bf16.msra.mxu0 %v424
  %440 = vmatpush.bf16.msra.mxu0 %v423
  %441 = vmatpush.bf16.msra.mxu0 %v422
  %442 = vmatpush.bf16.msra.mxu0 %v421
  %443 = vmatpush.bf16.msra.mxu0 %v420
  %444 = vmatmul.bf16.gmra.mxu0 %v367
  %v445 = vpop.f32.mrf.mxu0
  %v446 = vadd.f32 %v386, %v445
  %v447 = vpop.f32.mrf.mxu0
  %448 = vdwg.mxu0
  %v449 = vmax.f32 %v446, 0.0
  %v450 = vpack.c.bf16 %v449, %v449
  %v451 = vld [vmem:[%s3] sm:$0xf]
  %v452 = vld [vmem:[%s3 + $0x4] sm:$0xf]
  %v453 = vld [vmem:[%s3 + $0x8] sm:$0xf]
  %v454 = vld [vmem:[%s3 + $0xc] sm:$0xf]
  %v455 = vld [vmem:[%s3 + $0x10] sm:$0xf]
  %v456 = vld [vmem:[%s3 + $0x14] sm:$0xf]
  %v457 = vld [vmem:[%s3 + $0x18] sm:$0xf]
  %v458 = vld [vmem:[%s3 + $0x1c] sm:$0xf]
  %v459 = vld [vmem:[%s3 + $0x20] sm:$0xf]
  %v460 = vld [vmem:[%s3 + $0x24] sm:$0xf]
  %v461 = vld [vmem:[%s3 + $0x28] sm:$0xf]
  %v462 = vld [vmem:[%s3 + $0x2c] sm:$0xf]
  %v463 = vld [vmem:[%s3 + $0x30] sm:$0xf]
  %v464 = vld [vmem:[%s3 + $0x34] sm:$0xf]
  %v465 = vld [vmem:[%s3 + $0x38] sm:$0xf]
  %v466 = vld [vmem:[%s3 + $0x3c] sm:$0xf]
  %v467 = vld [vmem:[%s8] sm:$0x1]
  %v469 = vperm.slane %v467, 0
  %v487 = vunpack.c.l.b16 %v451
  %v488 = vunpack.c.l.b16 %v452
  %v489 = vunpack.c.l.b16 %v453
  %v490 = vunpack.c.l.b16 %v454
  %v491 = vunpack.c.l.b16 %v455
  %v492 = vunpack.c.l.b16 %v456
  %v493 = vunpack.c.l.b16 %v457
  %v494 = vunpack.c.l.b16 %v458
  %v495 = vunpack.c.l.b16 %v459
  %v496 = vunpack.c.l.b16 %v460
  %v497 = vunpack.c.l.b16 %v461
  %v498 = vunpack.c.l.b16 %v462
  %v499 = vunpack.c.l.b16 %v463
  %v500 = vunpack.c.l.b16 %v464
  %v501 = vunpack.c.l.b16 %v465
  %v502 = vunpack.c.l.b16 %v466
  %v503 = vpack.c.b16 %v488, %v487
  %v504 = vpack.c.b16 %v490, %v489
  %v505 = vpack.c.b16 %v492, %v491
  %v506 = vpack.c.b16 %v494, %v493
  %v507 = vpack.c.b16 %v496, %v495
  %v508 = vpack.c.b16 %v498, %v497
  %v509 = vpack.c.b16 %v500, %v499
  %v510 = vpack.c.b16 %v502, %v501
  %519 = vmatpush.bf16.msra.mxu0 %v510
  %520 = vmatpush.bf16.msra.mxu0 %v509
  %521 = vmatpush.bf16.msra.mxu0 %v508
  %522 = vmatpush.bf16.msra.mxu0 %v507
  %523 = vmatpush.bf16.msra.mxu0 %v506
  %524 = vmatpush.bf16.msra.mxu0 %v505
  %525 = vmatpush.bf16.msra.mxu0 %v504
  %526 = vmatpush.bf16.msra.mxu0 %v503
  %527 = vmatmul.bf16.gmra.mxu0 %v450
  %v528 = vpop.f32.mrf.mxu0
  %v529 = vadd.f32 %v469, %v528
  %v530 = vpop.f32.mrf.mxu0
  %531 = vdwg.mxu0
  %v532 = vmax.f32 %v529, 0.0
  %v533 = vpack.c.bf16 %v532, %v532
  %v534 = vld [vmem:[%s4] sm:$0xf]
  %v535 = vld [vmem:[%s4 + $0x4] sm:$0xf]
  %v536 = vld [vmem:[%s4 + $0x8] sm:$0xf]
  %v537 = vld [vmem:[%s4 + $0xc] sm:$0xf]
  %v538 = vld [vmem:[%s4 + $0x10] sm:$0xf]
  %v539 = vld [vmem:[%s4 + $0x14] sm:$0xf]
  %v540 = vld [vmem:[%s4 + $0x18] sm:$0xf]
  %v541 = vld [vmem:[%s4 + $0x1c] sm:$0xf]
  %v542 = vld [vmem:[%s4 + $0x20] sm:$0xf]
  %v543 = vld [vmem:[%s4 + $0x24] sm:$0xf]
  %v544 = vld [vmem:[%s4 + $0x28] sm:$0xf]
  %v545 = vld [vmem:[%s4 + $0x2c] sm:$0xf]
  %v546 = vld [vmem:[%s4 + $0x30] sm:$0xf]
  %v547 = vld [vmem:[%s4 + $0x34] sm:$0xf]
  %v548 = vld [vmem:[%s4 + $0x38] sm:$0xf]
  %v549 = vld [vmem:[%s4 + $0x3c] sm:$0xf]
  %v550 = vld [vmem:[%s9] sm:$0x1]
  %v552 = vperm.slane %v550, 0
  %v570 = vunpack.c.l.b16 %v534
  %v571 = vunpack.c.l.b16 %v535
  %v572 = vunpack.c.l.b16 %v536
  %v573 = vunpack.c.l.b16 %v537
  %v574 = vunpack.c.l.b16 %v538
  %v575 = vunpack.c.l.b16 %v539
  %v576 = vunpack.c.l.b16 %v540
  %v577 = vunpack.c.l.b16 %v541
  %v578 = vunpack.c.l.b16 %v542
  %v579 = vunpack.c.l.b16 %v543
  %v580 = vunpack.c.l.b16 %v544
  %v581 = vunpack.c.l.b16 %v545
  %v582 = vunpack.c.l.b16 %v546
  %v583 = vunpack.c.l.b16 %v547
  %v584 = vunpack.c.l.b16 %v548
  %v585 = vunpack.c.l.b16 %v549
  %v586 = vpack.c.b16 %v571, %v570
  %v587 = vpack.c.b16 %v573, %v572
  %v588 = vpack.c.b16 %v575, %v574
  %v589 = vpack.c.b16 %v577, %v576
  %v590 = vpack.c.b16 %v579, %v578
  %v591 = vpack.c.b16 %v581, %v580
  %v592 = vpack.c.b16 %v583, %v582
  %v593 = vpack.c.b16 %v585, %v584
  %602 = vmatpush.bf16.msra.mxu0 %v593
  %603 = vmatpush.bf16.msra.mxu0 %v592
  %604 = vmatpush.bf16.msra.mxu0 %v591
  %605 = vmatpush.bf16.msra.mxu0 %v590
  %606 = vmatpush.bf16.msra.mxu0 %v589
  %607 = vmatpush.bf16.msra.mxu0 %v588
  %608 = vmatpush.bf16.msra.mxu0 %v587
  %609 = vmatpush.bf16.msra.mxu0 %v586
  %610 = vmatmul.bf16.gmra.mxu0 %v533
  %v611 = vpop.f32.mrf.mxu0
  %v612 = vadd.f32 %v552, %v611
  %v613 = vpop.f32.mrf.mxu0
  %614 = vdwg.mxu0
  %v615 = vmax.f32 %v612, 0.0
  %v616 = vpack.c.bf16 %v615, %v615
  %v617 = vld [vmem:[%s5] sm:$0xf]
  %v618 = vld [vmem:[%s5 + $0x4] sm:$0xf]
  %v619 = vld [vmem:[%s5 + $0x8] sm:$0xf]
  %v620 = vld [vmem:[%s5 + $0xc] sm:$0xf]
  %v621 = vld [vmem:[%s5 + $0x10] sm:$0xf]
  %v622 = vld [vmem:[%s5 + $0x14] sm:$0xf]
  %v623 = vld [vmem:[%s5 + $0x18] sm:$0xf]
  %v624 = vld [vmem:[%s5 + $0x1c] sm:$0xf]
  %v625 = vld [vmem:[%s5 + $0x20] sm:$0xf]
  %v626 = vld [vmem:[%s5 + $0x24] sm:$0xf]
  %v627 = vld [vmem:[%s5 + $0x28] sm:$0xf]
  %v628 = vld [vmem:[%s5 + $0x2c] sm:$0xf]
  %v629 = vld [vmem:[%s5 + $0x30] sm:$0xf]
  %v630 = vld [vmem:[%s5 + $0x34] sm:$0xf]
  %v631 = vld [vmem:[%s5 + $0x38] sm:$0xf]
  %v632 = vld [vmem:[%s5 + $0x3c] sm:$0xf]
  %v633 = vld [vmem:[%s10] sm:$0x1]
  %v635 = vperm.slane %v633, 0
  %v653 = vunpack.c.l.b16 %v617
  %v654 = vunpack.c.l.b16 %v618
  %v655 = vunpack.c.l.b16 %v619
  %v656 = vunpack.c.l.b16 %v620
  %v657 = vunpack.c.l.b16 %v621
  %v658 = vunpack.c.l.b16 %v622
  %v659 = vunpack.c.l.b16 %v623
  %v660 = vunpack.c.l.b16 %v624
  %v661 = vunpack.c.l.b16 %v625
  %v662 = vunpack.c.l.b16 %v626
  %v663 = vunpack.c.l.b16 %v627
  %v664 = vunpack.c.l.b16 %v628
  %v665 = vunpack.c.l.b16 %v629
  %v666 = vunpack.c.l.b16 %v630
  %v667 = vunpack.c.l.b16 %v631
  %v668 = vunpack.c.l.b16 %v632
  %v669 = vpack.c.b16 %v654, %v653
  %v670 = vpack.c.b16 %v656, %v655
  %v671 = vpack.c.b16 %v658, %v657
  %v672 = vpack.c.b16 %v660, %v659
  %v673 = vpack.c.b16 %v662, %v661
  %v674 = vpack.c.b16 %v664, %v663
  %v675 = vpack.c.b16 %v666, %v665
  %v676 = vpack.c.b16 %v668, %v667
  %685 = vmatpush.bf16.msra.mxu0 %v676
  %686 = vmatpush.bf16.msra.mxu0 %v675
  %687 = vmatpush.bf16.msra.mxu0 %v674
  %688 = vmatpush.bf16.msra.mxu0 %v673
  %689 = vmatpush.bf16.msra.mxu0 %v672
  %690 = vmatpush.bf16.msra.mxu0 %v671
  %691 = vmatpush.bf16.msra.mxu0 %v670
  %692 = vmatpush.bf16.msra.mxu0 %v669
  %693 = vmatmul.bf16.gmra.mxu0 %v616
  %v694 = vpop.f32.mrf.mxu0
  %v695 = vadd.f32 %v635, %v694
  %v696 = vpop.f32.mrf.mxu0
  %697 = vdwg.mxu0
  %698 = vst [vmem:[%s11] sm:$0xff] %v695
  // Predicated region
  $region46: #{net_forward.5} parent=0 // pred_check
    _
  $region47: #{net_forward.5} parent=0 // pred_check_branch
    %700 = sbr.rel (0) target = $region49
  $region48: #{net_forward.5} parent=0 // pred_region
    _
  $region49: #{net_forward.5} parent=0 // pred_fallthru
    _
  // Predicated region
  $region50: #{net_forward.5} parent=0 // pred_check
    _
  $region51: #{net_forward.5} parent=0 // pred_check_branch
    %702 = sbr.rel (0) target = $region53
  $region52: #{net_forward.5} parent=0 // pred_region
    _
  $region53: #{net_forward.5} parent=0 // pred_fallthru
    _

</llo_original>
